<compile_context>
chip_gen: v6e
topology: v6e:2x2x1
jax: 0.10.0
libtpu: 0.0.40
codegen_flags: <defaults>
</compile_context>

<pallas_src>
import functools

import jax
import jax.numpy as jnp
from jax.experimental import pallas as pl
from jax.experimental.pallas import tpu as pltpu


def _round_up(x, m):
    return ((x + m - 1) // m) * m


def _pick_block_t(seq_len, batch, hidden,
                  budget_bytes=40 * 1024 * 1024, unroll_cap=32):
    """Timesteps per grid step.

    VMEM-budget-aware (sized so double-buffered gx/y blocks + weights + state
    fit comfortably inside v7x's 64-MiB physical VMEM), sublane-aligned, and
    capped so the statically unrolled kernel body keeps register pressure
    bounded."""
    if seq_len <= 8:
        return seq_len
    # Per-timestep bytes of double-buffered gx (B,1,4H) + y (B,1,H) blocks, f32.
    per_t = 2 * batch * 4 * hidden * 4 + 2 * batch * hidden * 4
    # Fixed residents: W_hh^T buffer(s) (bf16) + h/c scratch (f32).
    fixed = 2 * hidden * 4 * hidden * 2 + 2 * batch * hidden * 4
    avail = max(budget_bytes - fixed, per_t)
    cap = int(min(unroll_cap, max(8, (avail // per_t) // 8 * 8)))
    if seq_len <= cap:
        return seq_len if seq_len % 8 == 0 else min(cap, _round_up(seq_len, 8))
    return cap


def _whh_spec(hidden):
    # W_hh^T has a constant index_map (VMEM-resident across the whole grid):
    # request single-buffering when pipeline_mode is supported, halving its
    # resident VMEM (matters most on v7x's 64 MiB VMEM).
    idx = lambda bt, tb: (0, 0)
    try:
        return pl.BlockSpec((hidden, 4 * hidden), idx,
                            pipeline_mode=pl.Buffered(1))
    except TypeError:
        return pl.BlockSpec((hidden, 4 * hidden), idx)


def _lstm_recurrent_kernel(gx_ref, whh_ref, y_ref, h_scr, c_scr, *,
                           hidden, block_t, flatten_out):
    """One grid step == `block_t` timesteps of the LSTM recurrence.

    gx_ref : (Bt, TT, 4H) f32  precomputed x_t @ W_ih^T + (b_ih + b_hh), with
                               the i/f/o column groups pre-scaled by 0.5
    whh_ref: (H, 4H)      bf16 hidden->gates weights (i/f/o cols pre-scaled by
                               0.5); constant index_map, VMEM-resident
    y_ref  : (Bt, TT*H) or (Bt, TT, H) f32 hidden-state outputs for this block
    h_scr  : (Bt, H) f32  persistent hidden state (VMEM scratch)
    c_scr  : (Bt, H) f32  persistent cell state   (VMEM scratch)
    """
    tb = pl.program_id(1)

    # Initialize recurrent state once per batch tile (h0 = c0 = 0).
    @pl.when(tb == 0)
    def _():
        h_scr[...] = jnp.zeros_like(h_scr)
        c_scr[...] = jnp.zeros_like(c_scr)

    whh = whh_ref[...]        # loaded once; reused by every unrolled timestep
    h = h_scr[...]            # SSA-carried across the block (read once)
    c = c_scr[...]

    hs = []
    # Statically unrolled inner time loop; block_t is capped so the unrolled
    # body's live ranges stay within vreg budget.
    for i in range(block_t):
        # Only the recurrent projection remains on the serial chain; bf16 MXU
        # operands, f32 accumulation.
        gates = gx_ref[:, i, :] + jnp.dot(h.astype(jnp.bfloat16), whh,
                                          preferred_element_type=jnp.float32)
        # One full-width EUP tanh per step; i/f/o were pre-scaled by 0.5 so
        # sigmoid(z) == 0.5*tanh(0.5 z) + 0.5 falls out of lane-wise arithmetic.
        t = jnp.tanh(gates)
        i_g = 0.5 * t[:, 0 * hidden:1 * hidden] + 0.5
        f_g = 0.5 * t[:, 1 * hidden:2 * hidden] + 0.5
        g_g = t[:, 2 * hidden:3 * hidden]
        o_g = 0.5 * t[:, 3 * hidden:4 * hidden] + 0.5

        c = f_g * c + i_g * g_g
        h = o_g * jnp.tanh(c)

        if flatten_out:
            hs.append(h)                       # collected -> one wide store
        else:
            y_ref[:, i, :] = h.astype(y_ref.dtype)   # lane-dense when H%128==0

    # Write the recurrent state back once per block.
    h_scr[...] = h
    c_scr[...] = c

    if flatten_out:
        # Single lane-dense (Bt, TT*H) store; (t, h) ordering matches the
        # row-major (T, H) layout so the wrapper reshape is free.
        y_ref[...] = jnp.concatenate(hs, axis=-1).astype(y_ref.dtype)


@functools.partial(jax.jit, static_argnames=("hidden",))
def lstm_feature_extractor_pallas(x, w_ih, w_hh, b_ih, b_hh, *, hidden):
    """x: (B, T, D_in) f32; PyTorch nn.LSTM params
       (W_ih (4H,D), W_hh (4H,H), b_ih (4H,), b_hh (4H,)).
       Returns the full hidden-state sequence, (B, T, hidden) f32."""
    B, T, D = x.shape
    H = hidden

    # ---- Padding: sublane-dense batch, block-aligned time ------------------
    B_pad = _round_up(max(B, 8), 8)
    block_t = _pick_block_t(T, B_pad, H)
    T_pad = _round_up(T, block_t)
    n_tb = T_pad // block_t

    # v7x megacore: shard the batch across TensorCores via a leading
    # 'parallel' grid axis when the padded batch is large enough to be worth
    # it (no-op / single tile at small B, so v5e/v6e pay no loop overhead).
    n_bt = 2 if (B_pad >= 16 and B_pad % 16 == 0) else 1
    B_tile = B_pad // n_bt

    xp = jnp.pad(x, ((0, B_pad - B), (0, T_pad - T), (0, 0)))

    # ---- Hoisted input projection: one big, T-parallel MXU matmul ----------
    # gates_x[b, t, :] = x[b, t] @ W_ih^T + (b_ih + b_hh); batch-major so no
    # input/output transposes anywhere.  The i/f/o column groups are
    # pre-scaled by 0.5 (gate-activation fusion).
    bias = (b_ih + b_hh).astype(jnp.float32)
    col_scale = jnp.concatenate([
        jnp.full((H,), 0.5, jnp.float32),   # i
        jnp.full((H,), 0.5, jnp.float32),   # f
        jnp.ones((H,), jnp.float32),        # g
        jnp.full((H,), 0.5, jnp.float32),   # o
    ])
    gx = (jnp.einsum("btd,gd->btg",
                     xp.astype(jnp.bfloat16), w_ih.astype(jnp.bfloat16),
                     preferred_element_type=jnp.float32)
          + bias) * col_scale                                   # (Bp, Tp, 4H) f32

    # Recurrent weights: pre-transposed, i/f/o columns pre-scaled by 0.5 (a
    # power-of-two scale, so bf16 quantization is unchanged), bf16 operands.
    whh_t = (jnp.transpose(w_hh, (1, 0)) * col_scale[None, :]
             ).astype(jnp.bfloat16)                             # (H, 4H)

    # Lane-dense output path for narrow H: flatten (TT, H) into the minor dim.
    flatten_out = (H % 128 != 0) and ((block_t * H) % 128 == 0)

    kernel = functools.partial(_lstm_recurrent_kernel, hidden=H,
                               block_t=block_t, flatten_out=flatten_out)

    if flatten_out:
        out_shape = jax.ShapeDtypeStruct((B_pad, T_pad * H), jnp.float32)
        out_spec = pl.BlockSpec((B_tile, block_t * H), lambda bt, tb: (bt, tb))
    else:
        out_shape = jax.ShapeDtypeStruct((B_pad, T_pad, H), jnp.float32)
        out_spec = pl.BlockSpec((B_tile, block_t, H),
                                lambda bt, tb: (bt, tb, 0))

    y = pl.pallas_call(
        kernel,
        out_shape=out_shape,
        grid_spec=pltpu.PrefetchScalarGridSpec(
            num_scalar_prefetch=0,
            grid=(n_bt, n_tb),
            in_specs=[
                # gates_x block: TT timesteps per grid step, batch-major.
                pl.BlockSpec((B_tile, block_t, 4 * H),
                             lambda bt, tb: (bt, tb, 0)),
                # W_hh^T: constant index_map, VMEM-resident across the grid.
                _whh_spec(H),
            ],
            out_specs=out_spec,
            scratch_shapes=[
                pltpu.VMEM((B_tile, H), jnp.float32),   # h state
                pltpu.VMEM((B_tile, H), jnp.float32),   # c state
            ],
        ),
        compiler_params=pltpu.CompilerParams(
            # batch tiles independent; the time axis is the serial recurrence.
            dimension_semantics=("parallel", "arbitrary"),
            # Raised above the v5e 16-MiB scoped default so larger TT blocks
            # are usable; kept below v7x's 64-MiB physical VMEM.
            vmem_limit_bytes=48 * 1024 * 1024,
        ),
    )(gx, whh_t)

    if flatten_out:
        y = y.reshape(B_pad, T_pad, H)   # free row-major view
    return y[:B, :T]


def _lstm_reference(x, w_ih, w_hh, b_ih, b_hh, hidden):
    """Full-f32, exact-sigmoid reference matching torch.nn.LSTM
    (single layer, batch_first, h0 = c0 = 0, gate order [i, f, g, o])."""
    B, T, D = x.shape
    h0 = jnp.zeros((B, hidden), jnp.float32)
    c0 = jnp.zeros((B, hidden), jnp.float32)

    def step(carry, x_t):
        h, c = carry
        gates = x_t @ w_ih.T + b_ih + h @ w_hh.T + b_hh
        i_g = jax.nn.sigmoid(gates[:, 0 * hidden:1 * hidden])
        f_g = jax.nn.sigmoid(gates[:, 1 * hidden:2 * hidden])
        g_g = jnp.tanh(gates[:, 2 * hidden:3 * hidden])
        o_g = jax.nn.sigmoid(gates[:, 3 * hidden:4 * hidden])
        c_new = f_g * c + i_g * g_g
        h_new = o_g * jnp.tanh(c_new)
        return (h_new, c_new), h_new

    _, ys = jax.lax.scan(step, (h0, c0), jnp.transpose(x, (1, 0, 2)))
    return jnp.transpose(ys, (1, 0, 2))


if __name__ == "__main__":
    # Small shapes consistent with the module: batch=2, seq=8, input_dim=16,
    # hidden=32.
    B, T, D_IN, HIDDEN = 2, 8, 16, 32

    key = jax.random.PRNGKey(0)
    kx, k1, k2, k3, k4 = jax.random.split(key, 5)

    x = jax.random.normal(kx, (B, T, D_IN), dtype=jnp.float32)

    # PyTorch nn.LSTM parameter shapes: W_ih (4H, D), W_hh (4H, H),
    # b_ih (4H,), b_hh (4H,).
    scale = 1.0 / jnp.sqrt(jnp.float32(HIDDEN))
    w_ih = jax.random.uniform(k1, (4 * HIDDEN, D_IN), jnp.float32, -scale, scale)
    w_hh = jax.random.uniform(k2, (4 * HIDDEN, HIDDEN), jnp.float32, -scale, scale)
    b_ih = jax.random.uniform(k3, (4 * HIDDEN,), jnp.float32, -scale, scale)
    b_hh = jax.random.uniform(k4, (4 * HIDDEN,), jnp.float32, -scale, scale)

    out = lstm_feature_extractor_pallas(x, w_ih, w_hh, b_ih, b_hh, hidden=HIDDEN)
    out = jax.block_until_ready(out)

    ref = _lstm_reference(x, w_ih, w_hh, b_ih, b_hh, HIDDEN)
    assert out.shape == (B, T, HIDDEN), out.shape
    max_err = float(jnp.max(jnp.abs(out - ref)))
    assert jnp.allclose(out, ref, atol=2e-2, rtol=2e-2), (
        f"mismatch vs f32 reference, max abs err={max_err}")

    print("KERNEL_OK")
</pallas_src>

<mosaic_0001>
module attributes {stable_mosaic.version = 11 : i64} {
  func.func @_lstm_recurrent_kernel(%arg0: i32, %arg1: i32, %arg2: memref<8x8x128xf32, #tpu.memory_space<vmem>>, %arg3: memref<32x128xbf16, #tpu.memory_space<vmem>>, %arg4: memref<8x256xf32, #tpu.memory_space<vmem>>, %arg5: memref<8x32xf32, #tpu.memory_space<vmem>>, %arg6: memref<8x32xf32, #tpu.memory_space<vmem>>) attributes {dimension_semantics = [#tpu.dimension_semantics<parallel>, #tpu.dimension_semantics<arbitrary>], iteration_bounds = array<i64: 1, 1>, scalar_prefetch = 0 : i64, scratch_operands = 2 : i64, tpu.core_type = #tpu.core_type<tc>, window_params = [{transform_indices = @transform_0, window_bounds = array<i64: 8, 8, 128>}, {pipeline_mode = #tpu.pipeline_mode<synchronous>, transform_indices = @transform_1, window_bounds = array<i64: 32, 128>}, {transform_indices = @transform_2, window_bounds = array<i64: 8, 256>}]} {
    %c0_i32 = arith.constant 0 : i32
    %0 = arith.cmpi eq, %arg1, %c0_i32 : i32
    %1 = arith.extui %0 : i1 to i32
    %c0_i32_0 = arith.constant 0 : i32
    %2 = arith.cmpi ne, %1, %c0_i32_0 : i32
    scf.if %2 {
      %cst_84 = arith.constant 0.000000e+00 : f32
      %226 = vector.broadcast %cst_84 : f32 to vector<8x32xf32>
      %c0_85 = arith.constant 0 : index
      %c0_86 = arith.constant 0 : index
      %227 = vector.load %arg5[%c0_85, %c0_86] : memref<8x32xf32, #tpu.memory_space<vmem>>, vector<8x32xf32>
      tpu.vector_store %arg5[%c0_85, %c0_86], %226 {strides = array<i32>} : memref<8x32xf32, #tpu.memory_space<vmem>>, vector<8x32xf32>,
      %cst_87 = arith.constant 0.000000e+00 : f32
      %228 = vector.broadcast %cst_87 : f32 to vector<8x32xf32>
      %c0_88 = arith.constant 0 : index
      %c0_89 = arith.constant 0 : index
      %229 = vector.load %arg6[%c0_88, %c0_89] : memref<8x32xf32, #tpu.memory_space<vmem>>, vector<8x32xf32>
      tpu.vector_store %arg6[%c0_88, %c0_89], %228 {strides = array<i32>} : memref<8x32xf32, #tpu.memory_space<vmem>>, vector<8x32xf32>,
    } else {
    }
    %c0 = arith.constant 0 : index
    %c0_1 = arith.constant 0 : index
    %3 = vector.load %arg3[%c0, %c0_1] : memref<32x128xbf16, #tpu.memory_space<vmem>>, vector<32x128xbf16>
    %c0_2 = arith.constant 0 : index
    %c0_3 = arith.constant 0 : index
    %4 = vector.load %arg5[%c0_2, %c0_3] : memref<8x32xf32, #tpu.memory_space<vmem>>, vector<8x32xf32>
    %c0_4 = arith.constant 0 : index
    %c0_5 = arith.constant 0 : index
    %5 = vector.load %arg6[%c0_4, %c0_5] : memref<8x32xf32, #tpu.memory_space<vmem>>, vector<8x32xf32>
    %c0_6 = arith.constant 0 : index
    %c0_7 = arith.constant 0 : index
    %c0_8 = arith.constant 0 : index
    %6 = vector.load %arg2[%c0_6, %c0_7, %c0_8] : memref<8x8x128xf32, #tpu.memory_space<vmem>>, vector<8x1x128xf32>
    %7 = vector.shape_cast %6 : vector<8x1x128xf32> to vector<8x128xf32>
    %8 = arith.truncf %4 : vector<8x32xf32> to vector<8x32xbf16>
    %cst = arith.constant dense<0.000000e+00> : vector<8x128xf32>
    %9 = tpu.matmul %8, %3, %cst {dimension_numbers = #tpu.dot_dimension_numbers<[1], [0], [0], [1], [0, 0, 1, 1], [], []>} : vector<8x32xbf16>, vector<32x128xbf16>, vector<8x128xf32> -> vector<8x128xf32>
    %10 = arith.addf %7, %9 : vector<8x128xf32>
    %11 = math.tanh %10 : vector<8x128xf32>
    %12 = vector.extract_strided_slice %11 {offsets = [0, 0], sizes = [8, 32], strides = [1, 1]} : vector<8x128xf32> to vector<8x32xf32>
    %cst_9 = arith.constant 5.000000e-01 : f32
    %13 = vector.broadcast %cst_9 : f32 to vector<8x32xf32>
    %14 = arith.mulf %13, %12 : vector<8x32xf32>
    %cst_10 = arith.constant 5.000000e-01 : f32
    %15 = vector.broadcast %cst_10 : f32 to vector<8x32xf32>
    %16 = arith.addf %14, %15 : vector<8x32xf32>
    %17 = vector.extract_strided_slice %11 {offsets = [0, 32], sizes = [8, 32], strides = [1, 1]} : vector<8x128xf32> to vector<8x32xf32>
    %cst_11 = arith.constant 5.000000e-01 : f32
    %18 = vector.broadcast %cst_11 : f32 to vector<8x32xf32>
    %19 = arith.mulf %18, %17 : vector<8x32xf32>
    %cst_12 = arith.constant 5.000000e-01 : f32
    %20 = vector.broadcast %cst_12 : f32 to vector<8x32xf32>
    %21 = arith.addf %19, %20 : vector<8x32xf32>
    %22 = vector.extract_strided_slice %11 {offsets = [0, 64], sizes = [8, 32], strides = [1, 1]} : vector<8x128xf32> to vector<8x32xf32>
    %23 = vector.extract_strided_slice %11 {offsets = [0, 96], sizes = [8, 32], strides = [1, 1]} : vector<8x128xf32> to vector<8x32xf32>
    %cst_13 = arith.constant 5.000000e-01 : f32
    %24 = vector.broadcast %cst_13 : f32 to vector<8x32xf32>
    %25 = arith.mulf %24, %23 : vector<8x32xf32>
    %cst_14 = arith.constant 5.000000e-01 : f32
    %26 = vector.broadcast %cst_14 : f32 to vector<8x32xf32>
    %27 = arith.addf %25, %26 : vector<8x32xf32>
    %28 = arith.mulf %21, %5 : vector<8x32xf32>
    %29 = arith.mulf %16, %22 : vector<8x32xf32>
    %30 = arith.addf %28, %29 : vector<8x32xf32>
    %31 = math.tanh %30 : vector<8x32xf32>
    %32 = arith.mulf %27, %31 : vector<8x32xf32>
    %c0_15 = arith.constant 0 : index
    %c1 = arith.constant 1 : index
    %c0_16 = arith.constant 0 : index
    %33 = vector.load %arg2[%c0_15, %c1, %c0_16] : memref<8x8x128xf32, #tpu.memory_space<vmem>>, vector<8x1x128xf32>
    %34 = vector.shape_cast %33 : vector<8x1x128xf32> to vector<8x128xf32>
    %35 = arith.truncf %32 : vector<8x32xf32> to vector<8x32xbf16>
    %cst_17 = arith.constant dense<0.000000e+00> : vector<8x128xf32>
    %36 = tpu.matmul %35, %3, %cst_17 {dimension_numbers = #tpu.dot_dimension_numbers<[1], [0], [0], [1], [0, 0, 1, 1], [], []>} : vector<8x32xbf16>, vector<32x128xbf16>, vector<8x128xf32> -> vector<8x128xf32>
    %37 = arith.addf %34, %36 : vector<8x128xf32>
    %38 = math.tanh %37 : vector<8x128xf32>
    %39 = vector.extract_strided_slice %38 {offsets = [0, 0], sizes = [8, 32], strides = [1, 1]} : vector<8x128xf32> to vector<8x32xf32>
    %cst_18 = arith.constant 5.000000e-01 : f32
    %40 = vector.broadcast %cst_18 : f32 to vector<8x32xf32>
    %41 = arith.mulf %40, %39 : vector<8x32xf32>
    %cst_19 = arith.constant 5.000000e-01 : f32
    %42 = vector.broadcast %cst_19 : f32 to vector<8x32xf32>
    %43 = arith.addf %41, %42 : vector<8x32xf32>
    %44 = vector.extract_strided_slice %38 {offsets = [0, 32], sizes = [8, 32], strides = [1, 1]} : vector<8x128xf32> to vector<8x32xf32>
    %cst_20 = arith.constant 5.000000e-01 : f32
    %45 = vector.broadcast %cst_20 : f32 to vector<8x32xf32>
    %46 = arith.mulf %45, %44 : vector<8x32xf32>
    %cst_21 = arith.constant 5.000000e-01 : f32
    %47 = vector.broadcast %cst_21 : f32 to vector<8x32xf32>
    %48 = arith.addf %46, %47 : vector<8x32xf32>
    %49 = vector.extract_strided_slice %38 {offsets = [0, 64], sizes = [8, 32], strides = [1, 1]} : vector<8x128xf32> to vector<8x32xf32>
    %50 = vector.extract_strided_slice %38 {offsets = [0, 96], sizes = [8, 32], strides = [1, 1]} : vector<8x128xf32> to vector<8x32xf32>
    %cst_22 = arith.constant 5.000000e-01 : f32
    %51 = vector.broadcast %cst_22 : f32 to vector<8x32xf32>
    %52 = arith.mulf %51, %50 : vector<8x32xf32>
    %cst_23 = arith.constant 5.000000e-01 : f32
    %53 = vector.broadcast %cst_23 : f32 to vector<8x32xf32>
    %54 = arith.addf %52, %53 : vector<8x32xf32>
    %55 = arith.mulf %48, %30 : vector<8x32xf32>
    %56 = arith.mulf %43, %49 : vector<8x32xf32>
    %57 = arith.addf %55, %56 : vector<8x32xf32>
    %58 = math.tanh %57 : vector<8x32xf32>
    %59 = arith.mulf %54, %58 : vector<8x32xf32>
    %c0_24 = arith.constant 0 : index
    %c2 = arith.constant 2 : index
    %c0_25 = arith.constant 0 : index
    %60 = vector.load %arg2[%c0_24, %c2, %c0_25] : memref<8x8x128xf32, #tpu.memory_space<vmem>>, vector<8x1x128xf32>
    %61 = vector.shape_cast %60 : vector<8x1x128xf32> to vector<8x128xf32>
    %62 = arith.truncf %59 : vector<8x32xf32> to vector<8x32xbf16>
    %cst_26 = arith.constant dense<0.000000e+00> : vector<8x128xf32>
    %63 = tpu.matmul %62, %3, %cst_26 {dimension_numbers = #tpu.dot_dimension_numbers<[1], [0], [0], [1], [0, 0, 1, 1], [], []>} : vector<8x32xbf16>, vector<32x128xbf16>, vector<8x128xf32> -> vector<8x128xf32>
    %64 = arith.addf %61, %63 : vector<8x128xf32>
    %65 = math.tanh %64 : vector<8x128xf32>
    %66 = vector.extract_strided_slice %65 {offsets = [0, 0], sizes = [8, 32], strides = [1, 1]} : vector<8x128xf32> to vector<8x32xf32>
    %cst_27 = arith.constant 5.000000e-01 : f32
    %67 = vector.broadcast %cst_27 : f32 to vector<8x32xf32>
    %68 = arith.mulf %67, %66 : vector<8x32xf32>
    %cst_28 = arith.constant 5.000000e-01 : f32
    %69 = vector.broadcast %cst_28 : f32 to vector<8x32xf32>
    %70 = arith.addf %68, %69 : vector<8x32xf32>
    %71 = vector.extract_strided_slice %65 {offsets = [0, 32], sizes = [8, 32], strides = [1, 1]} : vector<8x128xf32> to vector<8x32xf32>
    %cst_29 = arith.constant 5.000000e-01 : f32
    %72 = vector.broadcast %cst_29 : f32 to vector<8x32xf32>
    %73 = arith.mulf %72, %71 : vector<8x32xf32>
    %cst_30 = arith.constant 5.000000e-01 : f32
    %74 = vector.broadcast %cst_30 : f32 to vector<8x32xf32>
    %75 = arith.addf %73, %74 : vector<8x32xf32>
    %76 = vector.extract_strided_slice %65 {offsets = [0, 64], sizes = [8, 32], strides = [1, 1]} : vector<8x128xf32> to vector<8x32xf32>
    %77 = vector.extract_strided_slice %65 {offsets = [0, 96], sizes = [8, 32], strides = [1, 1]} : vector<8x128xf32> to vector<8x32xf32>
    %cst_31 = arith.constant 5.000000e-01 : f32
    %78 = vector.broadcast %cst_31 : f32 to vector<8x32xf32>
    %79 = arith.mulf %78, %77 : vector<8x32xf32>
    %cst_32 = arith.constant 5.000000e-01 : f32
    %80 = vector.broadcast %cst_32 : f32 to vector<8x32xf32>
    %81 = arith.addf %79, %80 : vector<8x32xf32>
    %82 = arith.mulf %75, %57 : vector<8x32xf32>
    %83 = arith.mulf %70, %76 : vector<8x32xf32>
    %84 = arith.addf %82, %83 : vector<8x32xf32>
    %85 = math.tanh %84 : vector<8x32xf32>
    %86 = arith.mulf %81, %85 : vector<8x32xf32>
    %c0_33 = arith.constant 0 : index
    %c3 = arith.constant 3 : index
    %c0_34 = arith.constant 0 : index
    %87 = vector.load %arg2[%c0_33, %c3, %c0_34] : memref<8x8x128xf32, #tpu.memory_space<vmem>>, vector<8x1x128xf32>
    %88 = vector.shape_cast %87 : vector<8x1x128xf32> to vector<8x128xf32>
    %89 = arith.truncf %86 : vector<8x32xf32> to vector<8x32xbf16>
    %cst_35 = arith.constant dense<0.000000e+00> : vector<8x128xf32>
    %90 = tpu.matmul %89, %3, %cst_35 {dimension_numbers = #tpu.dot_dimension_numbers<[1], [0], [0], [1], [0, 0, 1, 1], [], []>} : vector<8x32xbf16>, vector<32x128xbf16>, vector<8x128xf32> -> vector<8x128xf32>
    %91 = arith.addf %88, %90 : vector<8x128xf32>
    %92 = math.tanh %91 : vector<8x128xf32>
    %93 = vector.extract_strided_slice %92 {offsets = [0, 0], sizes = [8, 32], strides = [1, 1]} : vector<8x128xf32> to vector<8x32xf32>
    %cst_36 = arith.constant 5.000000e-01 : f32
    %94 = vector.broadcast %cst_36 : f32 to vector<8x32xf32>
    %95 = arith.mulf %94, %93 : vector<8x32xf32>
    %cst_37 = arith.constant 5.000000e-01 : f32
    %96 = vector.broadcast %cst_37 : f32 to vector<8x32xf32>
    %97 = arith.addf %95, %96 : vector<8x32xf32>
    %98 = vector.extract_strided_slice %92 {offsets = [0, 32], sizes = [8, 32], strides = [1, 1]} : vector<8x128xf32> to vector<8x32xf32>
    %cst_38 = arith.constant 5.000000e-01 : f32
    %99 = vector.broadcast %cst_38 : f32 to vector<8x32xf32>
    %100 = arith.mulf %99, %98 : vector<8x32xf32>
    %cst_39 = arith.constant 5.000000e-01 : f32
    %101 = vector.broadcast %cst_39 : f32 to vector<8x32xf32>
    %102 = arith.addf %100, %101 : vector<8x32xf32>
    %103 = vector.extract_strided_slice %92 {offsets = [0, 64], sizes = [8, 32], strides = [1, 1]} : vector<8x128xf32> to vector<8x32xf32>
    %104 = vector.extract_strided_slice %92 {offsets = [0, 96], sizes = [8, 32], strides = [1, 1]} : vector<8x128xf32> to vector<8x32xf32>
    %cst_40 = arith.constant 5.000000e-01 : f32
    %105 = vector.broadcast %cst_40 : f32 to vector<8x32xf32>
    %106 = arith.mulf %105, %104 : vector<8x32xf32>
    %cst_41 = arith.constant 5.000000e-01 : f32
    %107 = vector.broadcast %cst_41 : f32 to vector<8x32xf32>
    %108 = arith.addf %106, %107 : vector<8x32xf32>
    %109 = arith.mulf %102, %84 : vector<8x32xf32>
    %110 = arith.mulf %97, %103 : vector<8x32xf32>
    %111 = arith.addf %109, %110 : vector<8x32xf32>
    %112 = math.tanh %111 : vector<8x32xf32>
    %113 = arith.mulf %108, %112 : vector<8x32xf32>
    %c0_42 = arith.constant 0 : index
    %c4 = arith.constant 4 : index
    %c0_43 = arith.constant 0 : index
    %114 = vector.load %arg2[%c0_42, %c4, %c0_43] : memref<8x8x128xf32, #tpu.memory_space<vmem>>, vector<8x1x128xf32>
    %115 = vector.shape_cast %114 : vector<8x1x128xf32> to vector<8x128xf32>
    %116 = arith.truncf %113 : vector<8x32xf32> to vector<8x32xbf16>
    %cst_44 = arith.constant dense<0.000000e+00> : vector<8x128xf32>
    %117 = tpu.matmul %116, %3, %cst_44 {dimension_numbers = #tpu.dot_dimension_numbers<[1], [0], [0], [1], [0, 0, 1, 1], [], []>} : vector<8x32xbf16>, vector<32x128xbf16>, vector<8x128xf32> -> vector<8x128xf32>
    %118 = arith.addf %115, %117 : vector<8x128xf32>
    %119 = math.tanh %118 : vector<8x128xf32>
    %120 = vector.extract_strided_slice %119 {offsets = [0, 0], sizes = [8, 32], strides = [1, 1]} : vector<8x128xf32> to vector<8x32xf32>
    %cst_45 = arith.constant 5.000000e-01 : f32
    %121 = vector.broadcast %cst_45 : f32 to vector<8x32xf32>
    %122 = arith.mulf %121, %120 : vector<8x32xf32>
    %cst_46 = arith.constant 5.000000e-01 : f32
    %123 = vector.broadcast %cst_46 : f32 to vector<8x32xf32>
    %124 = arith.addf %122, %123 : vector<8x32xf32>
    %125 = vector.extract_strided_slice %119 {offsets = [0, 32], sizes = [8, 32], strides = [1, 1]} : vector<8x128xf32> to vector<8x32xf32>
    %cst_47 = arith.constant 5.000000e-01 : f32
    %126 = vector.broadcast %cst_47 : f32 to vector<8x32xf32>
    %127 = arith.mulf %126, %125 : vector<8x32xf32>
    %cst_48 = arith.constant 5.000000e-01 : f32
    %128 = vector.broadcast %cst_48 : f32 to vector<8x32xf32>
    %129 = arith.addf %127, %128 : vector<8x32xf32>
    %130 = vector.extract_strided_slice %119 {offsets = [0, 64], sizes = [8, 32], strides = [1, 1]} : vector<8x128xf32> to vector<8x32xf32>
    %131 = vector.extract_strided_slice %119 {offsets = [0, 96], sizes = [8, 32], strides = [1, 1]} : vector<8x128xf32> to vector<8x32xf32>
    %cst_49 = arith.constant 5.000000e-01 : f32
    %132 = vector.broadcast %cst_49 : f32 to vector<8x32xf32>
    %133 = arith.mulf %132, %131 : vector<8x32xf32>
    %cst_50 = arith.constant 5.000000e-01 : f32
    %134 = vector.broadcast %cst_50 : f32 to vector<8x32xf32>
    %135 = arith.addf %133, %134 : vector<8x32xf32>
    %136 = arith.mulf %129, %111 : vector<8x32xf32>
    %137 = arith.mulf %124, %130 : vector<8x32xf32>
    %138 = arith.addf %136, %137 : vector<8x32xf32>
    %139 = math.tanh %138 : vector<8x32xf32>
    %140 = arith.mulf %135, %139 : vector<8x32xf32>
    %c0_51 = arith.constant 0 : index
    %c5 = arith.constant 5 : index
    %c0_52 = arith.constant 0 : index
    %141 = vector.load %arg2[%c0_51, %c5, %c0_52] : memref<8x8x128xf32, #tpu.memory_space<vmem>>, vector<8x1x128xf32>
    %142 = vector.shape_cast %141 : vector<8x1x128xf32> to vector<8x128xf32>
    %143 = arith.truncf %140 : vector<8x32xf32> to vector<8x32xbf16>
    %cst_53 = arith.constant dense<0.000000e+00> : vector<8x128xf32>
    %144 = tpu.matmul %143, %3, %cst_53 {dimension_numbers = #tpu.dot_dimension_numbers<[1], [0], [0], [1], [0, 0, 1, 1], [], []>} : vector<8x32xbf16>, vector<32x128xbf16>, vector<8x128xf32> -> vector<8x128xf32>
    %145 = arith.addf %142, %144 : vector<8x128xf32>
    %146 = math.tanh %145 : vector<8x128xf32>
    %147 = vector.extract_strided_slice %146 {offsets = [0, 0], sizes = [8, 32], strides = [1, 1]} : vector<8x128xf32> to vector<8x32xf32>
    %cst_54 = arith.constant 5.000000e-01 : f32
    %148 = vector.broadcast %cst_54 : f32 to vector<8x32xf32>
    %149 = arith.mulf %148, %147 : vector<8x32xf32>
    %cst_55 = arith.constant 5.000000e-01 : f32
    %150 = vector.broadcast %cst_55 : f32 to vector<8x32xf32>
    %151 = arith.addf %149, %150 : vector<8x32xf32>
    %152 = vector.extract_strided_slice %146 {offsets = [0, 32], sizes = [8, 32], strides = [1, 1]} : vector<8x128xf32> to vector<8x32xf32>
    %cst_56 = arith.constant 5.000000e-01 : f32
    %153 = vector.broadcast %cst_56 : f32 to vector<8x32xf32>
    %154 = arith.mulf %153, %152 : vector<8x32xf32>
    %cst_57 = arith.constant 5.000000e-01 : f32
    %155 = vector.broadcast %cst_57 : f32 to vector<8x32xf32>
    %156 = arith.addf %154, %155 : vector<8x32xf32>
    %157 = vector.extract_strided_slice %146 {offsets = [0, 64], sizes = [8, 32], strides = [1, 1]} : vector<8x128xf32> to vector<8x32xf32>
    %158 = vector.extract_strided_slice %146 {offsets = [0, 96], sizes = [8, 32], strides = [1, 1]} : vector<8x128xf32> to vector<8x32xf32>
    %cst_58 = arith.constant 5.000000e-01 : f32
    %159 = vector.broadcast %cst_58 : f32 to vector<8x32xf32>
    %160 = arith.mulf %159, %158 : vector<8x32xf32>
    %cst_59 = arith.constant 5.000000e-01 : f32
    %161 = vector.broadcast %cst_59 : f32 to vector<8x32xf32>
    %162 = arith.addf %160, %161 : vector<8x32xf32>
    %163 = arith.mulf %156, %138 : vector<8x32xf32>
    %164 = arith.mulf %151, %157 : vector<8x32xf32>
    %165 = arith.addf %163, %164 : vector<8x32xf32>
    %166 = math.tanh %165 : vector<8x32xf32>
    %167 = arith.mulf %162, %166 : vector<8x32xf32>
    %c0_60 = arith.constant 0 : index
    %c6 = arith.constant 6 : index
    %c0_61 = arith.constant 0 : index
    %168 = vector.load %arg2[%c0_60, %c6, %c0_61] : memref<8x8x128xf32, #tpu.memory_space<vmem>>, vector<8x1x128xf32>
    %169 = vector.shape_cast %168 : vector<8x1x128xf32> to vector<8x128xf32>
    %170 = arith.truncf %167 : vector<8x32xf32> to vector<8x32xbf16>
    %cst_62 = arith.constant dense<0.000000e+00> : vector<8x128xf32>
    %171 = tpu.matmul %170, %3, %cst_62 {dimension_numbers = #tpu.dot_dimension_numbers<[1], [0], [0], [1], [0, 0, 1, 1], [], []>} : vector<8x32xbf16>, vector<32x128xbf16>, vector<8x128xf32> -> vector<8x128xf32>
    %172 = arith.addf %169, %171 : vector<8x128xf32>
    %173 = math.tanh %172 : vector<8x128xf32>
    %174 = vector.extract_strided_slice %173 {offsets = [0, 0], sizes = [8, 32], strides = [1, 1]} : vector<8x128xf32> to vector<8x32xf32>
    %cst_63 = arith.constant 5.000000e-01 : f32
    %175 = vector.broadcast %cst_63 : f32 to vector<8x32xf32>
    %176 = arith.mulf %175, %174 : vector<8x32xf32>
    %cst_64 = arith.constant 5.000000e-01 : f32
    %177 = vector.broadcast %cst_64 : f32 to vector<8x32xf32>
    %178 = arith.addf %176, %177 : vector<8x32xf32>
    %179 = vector.extract_strided_slice %173 {offsets = [0, 32], sizes = [8, 32], strides = [1, 1]} : vector<8x128xf32> to vector<8x32xf32>
    %cst_65 = arith.constant 5.000000e-01 : f32
    %180 = vector.broadcast %cst_65 : f32 to vector<8x32xf32>
    %181 = arith.mulf %180, %179 : vector<8x32xf32>
    %cst_66 = arith.constant 5.000000e-01 : f32
    %182 = vector.broadcast %cst_66 : f32 to vector<8x32xf32>
    %183 = arith.addf %181, %182 : vector<8x32xf32>
    %184 = vector.extract_strided_slice %173 {offsets = [0, 64], sizes = [8, 32], strides = [1, 1]} : vector<8x128xf32> to vector<8x32xf32>
    %185 = vector.extract_strided_slice %173 {offsets = [0, 96], sizes = [8, 32], strides = [1, 1]} : vector<8x128xf32> to vector<8x32xf32>
    %cst_67 = arith.constant 5.000000e-01 : f32
    %186 = vector.broadcast %cst_67 : f32 to vector<8x32xf32>
    %187 = arith.mulf %186, %185 : vector<8x32xf32>
    %cst_68 = arith.constant 5.000000e-01 : f32
    %188 = vector.broadcast %cst_68 : f32 to vector<8x32xf32>
    %189 = arith.addf %187, %188 : vector<8x32xf32>
    %190 = arith.mulf %183, %165 : vector<8x32xf32>
    %191 = arith.mulf %178, %184 : vector<8x32xf32>
    %192 = arith.addf %190, %191 : vector<8x32xf32>
    %193 = math.tanh %192 : vector<8x32xf32>
    %194 = arith.mulf %189, %193 : vector<8x32xf32>
    %c0_69 = arith.constant 0 : index
    %c7 = arith.constant 7 : index
    %c0_70 = arith.constant 0 : index
    %195 = vector.load %arg2[%c0_69, %c7, %c0_70] : memref<8x8x128xf32, #tpu.memory_space<vmem>>, vector<8x1x128xf32>
    %196 = vector.shape_cast %195 : vector<8x1x128xf32> to vector<8x128xf32>
    %197 = arith.truncf %194 : vector<8x32xf32> to vector<8x32xbf16>
    %cst_71 = arith.constant dense<0.000000e+00> : vector<8x128xf32>
    %198 = tpu.matmul %197, %3, %cst_71 {dimension_numbers = #tpu.dot_dimension_numbers<[1], [0], [0], [1], [0, 0, 1, 1], [], []>} : vector<8x32xbf16>, vector<32x128xbf16>, vector<8x128xf32> -> vector<8x128xf32>
    %199 = arith.addf %196, %198 : vector<8x128xf32>
    %200 = math.tanh %199 : vector<8x128xf32>
    %201 = vector.extract_strided_slice %200 {offsets = [0, 0], sizes = [8, 32], strides = [1, 1]} : vector<8x128xf32> to vector<8x32xf32>
    %cst_72 = arith.constant 5.000000e-01 : f32
    %202 = vector.broadcast %cst_72 : f32 to vector<8x32xf32>
    %203 = arith.mulf %202, %201 : vector<8x32xf32>
    %cst_73 = arith.constant 5.000000e-01 : f32
    %204 = vector.broadcast %cst_73 : f32 to vector<8x32xf32>
    %205 = arith.addf %203, %204 : vector<8x32xf32>
    %206 = vector.extract_strided_slice %200 {offsets = [0, 32], sizes = [8, 32], strides = [1, 1]} : vector<8x128xf32> to vector<8x32xf32>
    %cst_74 = arith.constant 5.000000e-01 : f32
    %207 = vector.broadcast %cst_74 : f32 to vector<8x32xf32>
    %208 = arith.mulf %207, %206 : vector<8x32xf32>
    %cst_75 = arith.constant 5.000000e-01 : f32
    %209 = vector.broadcast %cst_75 : f32 to vector<8x32xf32>
    %210 = arith.addf %208, %209 : vector<8x32xf32>
    %211 = vector.extract_strided_slice %200 {offsets = [0, 64], sizes = [8, 32], strides = [1, 1]} : vector<8x128xf32> to vector<8x32xf32>
    %212 = vector.extract_strided_slice %200 {offsets = [0, 96], sizes = [8, 32], strides = [1, 1]} : vector<8x128xf32> to vector<8x32xf32>
    %cst_76 = arith.constant 5.000000e-01 : f32
    %213 = vector.broadcast %cst_76 : f32 to vector<8x32xf32>
    %214 = arith.mulf %213, %212 : vector<8x32xf32>
    %cst_77 = arith.constant 5.000000e-01 : f32
    %215 = vector.broadcast %cst_77 : f32 to vector<8x32xf32>
    %216 = arith.addf %214, %215 : vector<8x32xf32>
    %217 = arith.mulf %210, %192 : vector<8x32xf32>
    %218 = arith.mulf %205, %211 : vector<8x32xf32>
    %219 = arith.addf %217, %218 : vector<8x32xf32>
    %220 = math.tanh %219 : vector<8x32xf32>
    %221 = arith.mulf %216, %220 : vector<8x32xf32>
    %c0_78 = arith.constant 0 : index
    %c0_79 = arith.constant 0 : index
    %222 = vector.load %arg5[%c0_78, %c0_79] : memref<8x32xf32, #tpu.memory_space<vmem>>, vector<8x32xf32>
    tpu.vector_store %arg5[%c0_78, %c0_79], %221 {strides = array<i32>} : memref<8x32xf32, #tpu.memory_space<vmem>>, vector<8x32xf32>,
    %c0_80 = arith.constant 0 : index
    %c0_81 = arith.constant 0 : index
    %223 = vector.load %arg6[%c0_80, %c0_81] : memref<8x32xf32, #tpu.memory_space<vmem>>, vector<8x32xf32>
    tpu.vector_store %arg6[%c0_80, %c0_81], %219 {strides = array<i32>} : memref<8x32xf32, #tpu.memory_space<vmem>>, vector<8x32xf32>,
    %224 = tpu.concatenate %32, %59, %86, %113, %140, %167, %194, %221 in 1 : vector<8x32xf32>, vector<8x32xf32>, vector<8x32xf32>, vector<8x32xf32>, vector<8x32xf32>, vector<8x32xf32>, vector<8x32xf32>, vector<8x32xf32> -> vector<8x256xf32>
    %c0_82 = arith.constant 0 : index
    %c0_83 = arith.constant 0 : index
    %225 = vector.load %arg4[%c0_82, %c0_83] : memref<8x256xf32, #tpu.memory_space<vmem>>, vector<8x256xf32>
    tpu.vector_store %arg4[%c0_82, %c0_83], %224 {strides = array<i32>} : memref<8x256xf32, #tpu.memory_space<vmem>>, vector<8x256xf32>,
    return
  }
  func.func @transform_0(%arg0: i32, %arg1: i32) -> (i32, i32, i32) {
    %c0_i32 = arith.constant 0 : i32
    %c0_i32_0 = arith.constant 0 : i32
    return %arg0, %arg1, %c0_i32 : i32, i32, i32
  }
  func.func @transform_1(%arg0: i32, %arg1: i32) -> (i32, i32) {
    %c0_i32 = arith.constant 0 : i32
    %c0_i32_0 = arith.constant 0 : i32
    %c0_i32_1 = arith.constant 0 : i32
    return %c0_i32, %c0_i32_0 : i32, i32
  }
  func.func @transform_2(%arg0: i32, %arg1: i32) -> (i32, i32) {
    %c0_i32 = arith.constant 0 : i32
    return %arg0, %arg1 : i32, i32
  }
}

</mosaic_0001>

<llo_original>
// kernel: lstm_feature_extractor_pallas.1
$region0: #{lstm_feature_extractor_pallas.1}
  #allocation0 [shape = 'u32[]', space=smem, size = 0x4, offset = 0x4, fixed_abs, tag = 'smem constant byte address 0x4 - core index']
  #allocation1 [shape = 'u32[144,128]{1,0:T(1,128)}', space=vmem, size = 0x12000, scoped, tag = 'internal scratch']
  #allocation2 [shape = 'f32[8,32]{1,0:T(8,128)}', space=vmem, size = 0x1000, scoped, tag = 'scratch operand']
  #allocation3 [shape = 'f32[8,32]{1,0:T(8,128)}', space=vmem, size = 0x1000, scoped, tag = 'scratch operand']
  %s0 = inlined_call_operand.vmem [shape: f32[8,8,128], index: 0, kind: input, shape index: {}]
  %s1 = inlined_call_operand.vmem [shape: bf16[32,128], index: 1, kind: input, shape index: {}]
  %s2 = inlined_call_operand.vmem [shape: f32[8,256], index: 2, kind: output, shape index: {}]
  %s3 = sld [smem:[#allocation0]]
  $region22: #{lstm_feature_extractor_pallas.1} parent=0
    _
  %s5 = ssub.s32 1, %s3
  %s6 = scalar_select 0, %s5, %s3
  // Predicated region
  $region2: #{lstm_feature_extractor_pallas.1} parent=0 // pred_check
    _
  $region3: #{lstm_feature_extractor_pallas.1} parent=0 // pred_check_branch
    %8 = sbr.rel (0) target = $region5
  $region4: #{lstm_feature_extractor_pallas.1} parent=0 // pred_region
    _
  $region5: #{lstm_feature_extractor_pallas.1} parent=0 // pred_fallthru
    _
  // Predicated region
  $region6: #{lstm_feature_extractor_pallas.1} parent=0 // pred_check
    _
  $region7: #{lstm_feature_extractor_pallas.1} parent=0 // pred_check_branch
    %10 = sbr.rel (0) target = $region9
  $region8: #{lstm_feature_extractor_pallas.1} parent=0 // pred_region
    _
  $region9: #{lstm_feature_extractor_pallas.1} parent=0 // pred_fallthru
    _
  %p12 = scmp.eq.s32.totalorder 0, 0
  // Predicated region
  $region10: #{lstm_feature_extractor_pallas.1} parent=0 // pred_check
    %p13 = pneg %p12
  $region11: #{lstm_feature_extractor_pallas.1} parent=0 // pred_check_branch
    %15 = sbr.rel (%p13) target = $region13
  $region12: #{lstm_feature_extractor_pallas.1} parent=0 // pred_region
    %vm16 = vcmask 261120
    %17 = vst.msk [vmem:[#allocation2] sm:$0xff] %vm16, 0.0
    %18 = vst.msk [vmem:[#allocation3] sm:$0xff] %vm16, 0.0
  $region13: #{lstm_feature_extractor_pallas.1} parent=0 // pred_fallthru
    _
  %v19 = vld [vmem:[%s1] sm:$0xf]
  %v20 = vld [vmem:[%s1 + $0x4] sm:$0xf]
  %v21 = vld [vmem:[%s1 + $0x8] sm:$0xf]
  %v22 = vld [vmem:[%s1 + $0xc] sm:$0xf]
  %v23 = vld [vmem:[#allocation2] sm:$0xff]
  %v24 = vld [vmem:[#allocation3] sm:$0xff]
  %v25 = vld [vmem:[%s0] sm:$0x1]
  %v26 = vld [vmem:[%s0 + $0x8] sm:$0x1]
  %v27 = vld [vmem:[%s0 + $0x10] sm:$0x1]
  %v28 = vld [vmem:[%s0 + $0x18] sm:$0x1]
  %v29 = vld [vmem:[%s0 + $0x20] sm:$0x1]
  %v30 = vld [vmem:[%s0 + $0x28] sm:$0x1]
  %v31 = vld [vmem:[%s0 + $0x30] sm:$0x1]
  %v32 = vld [vmem:[%s0 + $0x38] sm:$0x1]
  %v33 = vpack.c.bf16 %v23, %v23
  %v38 = vunpack.c.l.b16 %v19
  %v39 = vunpack.c.l.b16 %v20
  %v40 = vunpack.c.l.b16 %v21
  %v41 = vunpack.c.l.b16 %v22
  %v42 = vpack.c.b16 %v39, %v38
  %v43 = vpack.c.b16 %v41, %v40
  %vm46 = vcmask 261120
  %v48 = vsel %vm46, %v33, 0
  %50 = vmatprep.subr.bf16.mxu0 0
  %51 = vmatpush1.bf16.msra.mxu0 0
  %52 = vmatprep.subr.bf16.mxu0 0
  %53 = vmatpush1.bf16.msra.mxu0 0
  %54 = vmatprep.subr.bf16.mxu0 0
  %55 = vmatpush1.bf16.msra.mxu0 0
  %56 = vmatprep.subr.bf16.mxu0 0
  %57 = vmatpush1.bf16.msra.mxu0 0
  %58 = vmatprep.subr.bf16.mxu0 0
  %59 = vmatpush1.bf16.msra.mxu0 0
  %60 = vmatprep.subr.bf16.mxu0 0
  %61 = vmatpush1.bf16.msra.mxu0 0
  %62 = vmatprep.subr.bf16.mxu0 0
  %63 = vmatpush1.bf16.msra.mxu0 %v43
  %64 = vmatprep.subr.bf16.mxu0 0
  %65 = vmatpush1.bf16.msra.mxu0 %v42
  %66 = vmatprep.subr.bf16.mxu0 0
  %67 = vmatpush2.bf16.msra.mxu0 0
  %68 = vmatprep.subr.bf16.mxu0 0
  %69 = vmatpush2.bf16.msra.mxu0 0
  %70 = vmatprep.subr.bf16.mxu0 0
  %71 = vmatpush2.bf16.msra.mxu0 0
  %72 = vmatprep.subr.bf16.mxu0 0
  %73 = vmatpush2.bf16.msra.mxu0 0
  %74 = vmatprep.subr.bf16.mxu0 0
  %75 = vmatpush2.bf16.msra.mxu0 0
  %76 = vmatprep.subr.bf16.mxu0 0
  %77 = vmatpush2.bf16.msra.mxu0 0
  %78 = vmatprep.subr.bf16.mxu0 0
  %79 = vmatpush2.bf16.msra.mxu0 0
  %80 = vmatprep.subr.bf16.mxu0 0
  %81 = vmatpush2.bf16.msra.mxu0 0
  %82 = vmatprep.mubr.bf16.mxu0 0
  %83 = vmatmul.mubr.bf16.gmra.mxu0 %v48
  %v84 = vpop.f32.mrf.mxu0
  %v85 = vadd.f32 0.0, %v84
  %v86 = vpop.f32.mrf.mxu0
  %v87 = vpop.f32.mrf.mxu0
  %v88 = vpop.f32.mrf.mxu0
  %89 = vdwg.mxu0
  %v91 = vrot.slane %v85, 1
  %v92 = vrot.slane %v85, 2
  %v93 = vrot.slane %v85, 3
  %v94 = vrot.slane %v85, 4
  %v95 = vrot.slane %v85, 5
  %v96 = vrot.slane %v85, 6
  %v97 = vrot.slane %v85, 7
  %v106 = vadd.f32 %v25, %v85
  %v107 = vadd.f32 %v26, %v91
  %v108 = vadd.f32 %v27, %v92
  %v109 = vadd.f32 %v28, %v93
  %v110 = vadd.f32 %v29, %v94
  %v111 = vadd.f32 %v30, %v95
  %v112 = vadd.f32 %v31, %v96
  %v113 = vadd.f32 %v32, %v97
  %v114 = vtanh.pop %v106
  %v115 = vtanh.pop %v107
  %v116 = vtanh.pop %v108
  %v117 = vtanh.pop %v109
  %v118 = vtanh.pop %v110
  %v119 = vtanh.pop %v111
  %v120 = vtanh.pop %v112
  %v121 = vtanh.pop %v113
  %v122 = vmul.f32 %v114, 0.5
  %v123 = vmul.f32 %v115, 0.5
  %v124 = vmul.f32 %v116, 0.5
  %v125 = vmul.f32 %v117, 0.5
  %v126 = vmul.f32 %v118, 0.5
  %v127 = vmul.f32 %v119, 0.5
  %v128 = vmul.f32 %v120, 0.5
  %v129 = vmul.f32 %v121, 0.5
  %v130 = vadd.f32 %v122, 0.5
  %v131 = vadd.f32 %v123, 0.5
  %v132 = vadd.f32 %v124, 0.5
  %v133 = vadd.f32 %v125, 0.5
  %v134 = vadd.f32 %v126, 0.5
  %v135 = vadd.f32 %v127, 0.5
  %v136 = vadd.f32 %v128, 0.5
  %v137 = vadd.f32 %v129, 0.5
  %v139 = vrot.slane %v24, 1
  %v140 = vrot.slane %v24, 2
  %v141 = vrot.slane %v24, 3
  %v142 = vrot.slane %v24, 4
  %v143 = vrot.slane %v24, 5
  %v144 = vrot.slane %v24, 6
  %v145 = vrot.slane %v24, 7
  %146 = vrot.lane.b32.xlu0 %v24, 32
  %v147 = vpop.permute.xlu0 %146
  %148 = vrot.lane.b32.xlu0 %v139, 32
  %v149 = vpop.permute.xlu0 %148
  %150 = vrot.lane.b32.xlu0 %v140, 32
  %v151 = vpop.permute.xlu0 %150
  %152 = vrot.lane.b32.xlu0 %v141, 32
  %v153 = vpop.permute.xlu0 %152
  %154 = vrot.lane.b32.xlu0 %v142, 32
  %v155 = vpop.permute.xlu0 %154
  %156 = vrot.lane.b32.xlu0 %v143, 32
  %v157 = vpop.permute.xlu0 %156
  %158 = vrot.lane.b32.xlu0 %v144, 32
  %v159 = vpop.permute.xlu0 %158
  %160 = vrot.lane.b32.xlu0 %v145, 32
  %v161 = vpop.permute.xlu0 %160
  %v170 = vmul.f32 %v130, %v147
  %v171 = vmul.f32 %v131, %v149
  %v172 = vmul.f32 %v132, %v151
  %v173 = vmul.f32 %v133, %v153
  %v174 = vmul.f32 %v134, %v155
  %v175 = vmul.f32 %v135, %v157
  %v176 = vmul.f32 %v136, %v159
  %v177 = vmul.f32 %v137, %v161
  %186 = vrot.lane.b32.xlu0 %v114, 64
  %v187 = vpop.permute.xlu0 %186
  %188 = vrot.lane.b32.xlu0 %v115, 64
  %v189 = vpop.permute.xlu0 %188
  %190 = vrot.lane.b32.xlu0 %v116, 64
  %v191 = vpop.permute.xlu0 %190
  %192 = vrot.lane.b32.xlu0 %v117, 64
  %v193 = vpop.permute.xlu0 %192
  %194 = vrot.lane.b32.xlu0 %v118, 64
  %v195 = vpop.permute.xlu0 %194
  %196 = vrot.lane.b32.xlu0 %v119, 64
  %v197 = vpop.permute.xlu0 %196
  %198 = vrot.lane.b32.xlu0 %v120, 64
  %v199 = vpop.permute.xlu0 %198
  %200 = vrot.lane.b32.xlu0 %v121, 64
  %v201 = vpop.permute.xlu0 %200
  %v210 = vmul.f32 %v130, %v187
  %v211 = vmul.f32 %v131, %v189
  %v212 = vmul.f32 %v132, %v191
  %v213 = vmul.f32 %v133, %v193
  %v214 = vmul.f32 %v134, %v195
  %v215 = vmul.f32 %v135, %v197
  %v216 = vmul.f32 %v136, %v199
  %v217 = vmul.f32 %v137, %v201
  %226 = vrot.lane.b32.xlu0 %v210, 32
  %v227 = vpop.permute.xlu0 %226
  %228 = vrot.lane.b32.xlu0 %v211, 32
  %v229 = vpop.permute.xlu0 %228
  %230 = vrot.lane.b32.xlu0 %v212, 32
  %v231 = vpop.permute.xlu0 %230
  %232 = vrot.lane.b32.xlu0 %v213, 32
  %v233 = vpop.permute.xlu0 %232
  %234 = vrot.lane.b32.xlu0 %v214, 32
  %v235 = vpop.permute.xlu0 %234
  %236 = vrot.lane.b32.xlu0 %v215, 32
  %v237 = vpop.permute.xlu0 %236
  %238 = vrot.lane.b32.xlu0 %v216, 32
  %v239 = vpop.permute.xlu0 %238
  %240 = vrot.lane.b32.xlu0 %v217, 32
  %v241 = vpop.permute.xlu0 %240
  %v250 = vadd.f32 %v170, %v227
  %v251 = vadd.f32 %v171, %v229
  %v252 = vadd.f32 %v172, %v231
  %v253 = vadd.f32 %v173, %v233
  %v254 = vadd.f32 %v174, %v235
  %v255 = vadd.f32 %v175, %v237
  %v256 = vadd.f32 %v176, %v239
  %v257 = vadd.f32 %v177, %v241
  %v258 = vtanh.pop %v250
  %v259 = vtanh.pop %v251
  %v260 = vtanh.pop %v252
  %v261 = vtanh.pop %v253
  %v262 = vtanh.pop %v254
  %v263 = vtanh.pop %v255
  %v264 = vtanh.pop %v256
  %v265 = vtanh.pop %v257
  %274 = vrot.lane.b32.xlu0 %v258, 64
  %v275 = vpop.permute.xlu0 %274
  %276 = vrot.lane.b32.xlu0 %v259, 64
  %v277 = vpop.permute.xlu0 %276
  %278 = vrot.lane.b32.xlu0 %v260, 64
  %v279 = vpop.permute.xlu0 %278
  %280 = vrot.lane.b32.xlu0 %v261, 64
  %v281 = vpop.permute.xlu0 %280
  %282 = vrot.lane.b32.xlu0 %v262, 64
  %v283 = vpop.permute.xlu0 %282
  %284 = vrot.lane.b32.xlu0 %v263, 64
  %v285 = vpop.permute.xlu0 %284
  %286 = vrot.lane.b32.xlu0 %v264, 64
  %v287 = vpop.permute.xlu0 %286
  %288 = vrot.lane.b32.xlu0 %v265, 64
  %v289 = vpop.permute.xlu0 %288
  %v298 = vmul.f32 %v130, %v275
  %v299 = vmul.f32 %v131, %v277
  %v300 = vmul.f32 %v132, %v279
  %v301 = vmul.f32 %v133, %v281
  %v302 = vmul.f32 %v134, %v283
  %v303 = vmul.f32 %v135, %v285
  %v304 = vmul.f32 %v136, %v287
  %v305 = vmul.f32 %v137, %v289
  %v306 = vld [vmem:[%s0 + $0x1] sm:$0x1]
  %v307 = vld [vmem:[%s0 + $0x9] sm:$0x1]
  %v308 = vld [vmem:[%s0 + $0x11] sm:$0x1]
  %v309 = vld [vmem:[%s0 + $0x19] sm:$0x1]
  %v310 = vld [vmem:[%s0 + $0x21] sm:$0x1]
  %v311 = vld [vmem:[%s0 + $0x29] sm:$0x1]
  %v312 = vld [vmem:[%s0 + $0x31] sm:$0x1]
  %v313 = vld [vmem:[%s0 + $0x39] sm:$0x1]
  %v314 = vpack.c.bf16 %v298, %v298
  %v315 = vpack.c.bf16 %v299, %v299
  %v316 = vpack.c.bf16 %v300, %v300
  %v317 = vpack.c.bf16 %v301, %v301
  %v318 = vpack.c.bf16 %v302, %v302
  %v319 = vpack.c.bf16 %v303, %v303
  %v320 = vpack.c.bf16 %v304, %v304
  %v321 = vpack.c.bf16 %v305, %v305
  %v330 = vunpack.c.l.b16 %v314
  %v331 = vunpack.c.l.b16 %v315
  %v332 = vunpack.c.l.b16 %v316
  %v333 = vunpack.c.l.b16 %v317
  %v334 = vunpack.c.l.b16 %v318
  %v335 = vunpack.c.l.b16 %v319
  %v336 = vunpack.c.l.b16 %v320
  %v337 = vunpack.c.l.b16 %v321
  %v338 = vrot.slane %v331, 7
  %vm339 = vcmask 1041409
  %v340 = vsel %vm339, %v338, %v330
  %v341 = vrot.slane %v332, 6
  %vm342 = vcmask 1042434
  %v343 = vsel %vm342, %v341, %v340
  %v344 = vrot.slane %v333, 5
  %vm345 = vcmask 1043459
  %v346 = vsel %vm345, %v344, %v343
  %v347 = vrot.slane %v334, 4
  %vm348 = vcmask 1044484
  %v349 = vsel %vm348, %v347, %v346
  %v350 = vrot.slane %v335, 3
  %vm351 = vcmask 1045509
  %v352 = vsel %vm351, %v350, %v349
  %v353 = vrot.slane %v336, 2
  %vm354 = vcmask 1046534
  %v355 = vsel %vm354, %v353, %v352
  %v356 = vrot.slane %v337, 1
  %vm357 = vcmask 1047559
  %v358 = vsel %vm357, %v356, %v355
  %v359 = vpack.c.b16 %v358, %v358
  %360 = vrot.lane.b32.xlu0 %v359, 32
  %v361 = vpop.permute.xlu0 %360
  %v363 = vsel %vm46, %v361, 0
  %365 = vmatprep.subr.bf16.mxu0 0
  %366 = vmatpush1.bf16.msra.mxu0 0
  %367 = vmatprep.subr.bf16.mxu0 0
  %368 = vmatpush1.bf16.msra.mxu0 0
  %369 = vmatprep.subr.bf16.mxu0 0
  %370 = vmatpush1.bf16.msra.mxu0 0
  %371 = vmatprep.subr.bf16.mxu0 0
  %372 = vmatpush1.bf16.msra.mxu0 0
  %373 = vmatprep.subr.bf16.mxu0 0
  %374 = vmatpush1.bf16.msra.mxu0 0
  %375 = vmatprep.subr.bf16.mxu0 0
  %376 = vmatpush1.bf16.msra.mxu0 0
  %377 = vmatprep.subr.bf16.mxu0 0
  %378 = vmatpush1.bf16.msra.mxu0 %v43
  %379 = vmatprep.subr.bf16.mxu0 0
  %380 = vmatpush1.bf16.msra.mxu0 %v42
  %381 = vmatprep.subr.bf16.mxu0 0
  %382 = vmatpush2.bf16.msra.mxu0 0
  %383 = vmatprep.subr.bf16.mxu0 0
  %384 = vmatpush2.bf16.msra.mxu0 0
  %385 = vmatprep.subr.bf16.mxu0 0
  %386 = vmatpush2.bf16.msra.mxu0 0
  %387 = vmatprep.subr.bf16.mxu0 0
  %388 = vmatpush2.bf16.msra.mxu0 0
  %389 = vmatprep.subr.bf16.mxu0 0
  %390 = vmatpush2.bf16.msra.mxu0 0
  %391 = vmatprep.subr.bf16.mxu0 0
  %392 = vmatpush2.bf16.msra.mxu0 0
  %393 = vmatprep.subr.bf16.mxu0 0
  %394 = vmatpush2.bf16.msra.mxu0 0
  %395 = vmatprep.subr.bf16.mxu0 0
  %396 = vmatpush2.bf16.msra.mxu0 0
  %397 = vmatprep.mubr.bf16.mxu0 0
  %398 = vmatmul.mubr.bf16.gmra.mxu0 %v363
  %v399 = vpop.f32.mrf.mxu0
  %v400 = vadd.f32 0.0, %v399
  %v401 = vpop.f32.mrf.mxu0
  %v402 = vpop.f32.mrf.mxu0
  %v403 = vpop.f32.mrf.mxu0
  %404 = vdwg.mxu0
  %v406 = vrot.slane %v400, 1
  %v407 = vrot.slane %v400, 2
  %v408 = vrot.slane %v400, 3
  %v409 = vrot.slane %v400, 4
  %v410 = vrot.slane %v400, 5
  %v411 = vrot.slane %v400, 6
  %v412 = vrot.slane %v400, 7
  %v421 = vadd.f32 %v306, %v400
  %v422 = vadd.f32 %v307, %v406
  %v423 = vadd.f32 %v308, %v407
  %v424 = vadd.f32 %v309, %v408
  %v425 = vadd.f32 %v310, %v409
  %v426 = vadd.f32 %v311, %v410
  %v427 = vadd.f32 %v312, %v411
  %v428 = vadd.f32 %v313, %v412
  %v429 = vtanh.pop %v421
  %v430 = vtanh.pop %v422
  %v431 = vtanh.pop %v423
  %v432 = vtanh.pop %v424
  %v433 = vtanh.pop %v425
  %v434 = vtanh.pop %v426
  %v435 = vtanh.pop %v427
  %v436 = vtanh.pop %v428
  %v437 = vmul.f32 %v429, 0.5
  %v438 = vmul.f32 %v430, 0.5
  %v439 = vmul.f32 %v431, 0.5
  %v440 = vmul.f32 %v432, 0.5
  %v441 = vmul.f32 %v433, 0.5
  %v442 = vmul.f32 %v434, 0.5
  %v443 = vmul.f32 %v435, 0.5
  %v444 = vmul.f32 %v436, 0.5
  %v445 = vadd.f32 %v437, 0.5
  %v446 = vadd.f32 %v438, 0.5
  %v447 = vadd.f32 %v439, 0.5
  %v448 = vadd.f32 %v440, 0.5
  %v449 = vadd.f32 %v441, 0.5
  %v450 = vadd.f32 %v442, 0.5
  %v451 = vadd.f32 %v443, 0.5
  %v452 = vadd.f32 %v444, 0.5
  %v453 = vmul.f32 %v445, %v250
  %v454 = vmul.f32 %v446, %v251
  %v455 = vmul.f32 %v447, %v252
  %v456 = vmul.f32 %v448, %v253
  %v457 = vmul.f32 %v449, %v254
  %v458 = vmul.f32 %v450, %v255
  %v459 = vmul.f32 %v451, %v256
  %v460 = vmul.f32 %v452, %v257
  %469 = vrot.lane.b32.xlu0 %v429, 64
  %v470 = vpop.permute.xlu0 %469
  %471 = vrot.lane.b32.xlu0 %v430, 64
  %v472 = vpop.permute.xlu0 %471
  %473 = vrot.lane.b32.xlu0 %v431, 64
  %v474 = vpop.permute.xlu0 %473
  %475 = vrot.lane.b32.xlu0 %v432, 64
  %v476 = vpop.permute.xlu0 %475
  %477 = vrot.lane.b32.xlu0 %v433, 64
  %v478 = vpop.permute.xlu0 %477
  %479 = vrot.lane.b32.xlu0 %v434, 64
  %v480 = vpop.permute.xlu0 %479
  %481 = vrot.lane.b32.xlu0 %v435, 64
  %v482 = vpop.permute.xlu0 %481
  %483 = vrot.lane.b32.xlu0 %v436, 64
  %v484 = vpop.permute.xlu0 %483
  %v493 = vmul.f32 %v445, %v470
  %v494 = vmul.f32 %v446, %v472
  %v495 = vmul.f32 %v447, %v474
  %v496 = vmul.f32 %v448, %v476
  %v497 = vmul.f32 %v449, %v478
  %v498 = vmul.f32 %v450, %v480
  %v499 = vmul.f32 %v451, %v482
  %v500 = vmul.f32 %v452, %v484
  %509 = vrot.lane.b32.xlu0 %v493, 32
  %v510 = vpop.permute.xlu0 %509
  %511 = vrot.lane.b32.xlu0 %v494, 32
  %v512 = vpop.permute.xlu0 %511
  %513 = vrot.lane.b32.xlu0 %v495, 32
  %v514 = vpop.permute.xlu0 %513
  %515 = vrot.lane.b32.xlu0 %v496, 32
  %v516 = vpop.permute.xlu0 %515
  %517 = vrot.lane.b32.xlu0 %v497, 32
  %v518 = vpop.permute.xlu0 %517
  %519 = vrot.lane.b32.xlu0 %v498, 32
  %v520 = vpop.permute.xlu0 %519
  %521 = vrot.lane.b32.xlu0 %v499, 32
  %v522 = vpop.permute.xlu0 %521
  %523 = vrot.lane.b32.xlu0 %v500, 32
  %v524 = vpop.permute.xlu0 %523
  %v533 = vadd.f32 %v453, %v510
  %v534 = vadd.f32 %v454, %v512
  %v535 = vadd.f32 %v455, %v514
  %v536 = vadd.f32 %v456, %v516
  %v537 = vadd.f32 %v457, %v518
  %v538 = vadd.f32 %v458, %v520
  %v539 = vadd.f32 %v459, %v522
  %v540 = vadd.f32 %v460, %v524
  %v541 = vtanh.pop %v533
  %v542 = vtanh.pop %v534
  %v543 = vtanh.pop %v535
  %v544 = vtanh.pop %v536
  %v545 = vtanh.pop %v537
  %v546 = vtanh.pop %v538
  %v547 = vtanh.pop %v539
  %v548 = vtanh.pop %v540
  %557 = vrot.lane.b32.xlu0 %v541, 64
  %v558 = vpop.permute.xlu0 %557
  %559 = vrot.lane.b32.xlu0 %v542, 64
  %v560 = vpop.permute.xlu0 %559
  %561 = vrot.lane.b32.xlu0 %v543, 64
  %v562 = vpop.permute.xlu0 %561
  %563 = vrot.lane.b32.xlu0 %v544, 64
  %v564 = vpop.permute.xlu0 %563
  %565 = vrot.lane.b32.xlu0 %v545, 64
  %v566 = vpop.permute.xlu0 %565
  %567 = vrot.lane.b32.xlu0 %v546, 64
  %v568 = vpop.permute.xlu0 %567
  %569 = vrot.lane.b32.xlu0 %v547, 64
  %v570 = vpop.permute.xlu0 %569
  %571 = vrot.lane.b32.xlu0 %v548, 64
  %v572 = vpop.permute.xlu0 %571
  %v581 = vmul.f32 %v445, %v558
  %v582 = vmul.f32 %v446, %v560
  %v583 = vmul.f32 %v447, %v562
  %v584 = vmul.f32 %v448, %v564
  %v585 = vmul.f32 %v449, %v566
  %v586 = vmul.f32 %v450, %v568
  %v587 = vmul.f32 %v451, %v570
  %v588 = vmul.f32 %v452, %v572
  %v589 = vld [vmem:[%s0 + $0x2] sm:$0x1]
  %v590 = vld [vmem:[%s0 + $0xa] sm:$0x1]
  %v591 = vld [vmem:[%s0 + $0x12] sm:$0x1]
  %v592 = vld [vmem:[%s0 + $0x1a] sm:$0x1]
  %v593 = vld [vmem:[%s0 + $0x22] sm:$0x1]
  %v594 = vld [vmem:[%s0 + $0x2a] sm:$0x1]
  %v595 = vld [vmem:[%s0 + $0x32] sm:$0x1]
  %v596 = vld [vmem:[%s0 + $0x3a] sm:$0x1]
  %v597 = vpack.c.bf16 %v581, %v581
  %v598 = vpack.c.bf16 %v582, %v582
  %v599 = vpack.c.bf16 %v583, %v583
  %v600 = vpack.c.bf16 %v584, %v584
  %v601 = vpack.c.bf16 %v585, %v585
  %v602 = vpack.c.bf16 %v586, %v586
  %v603 = vpack.c.bf16 %v587, %v587
  %v604 = vpack.c.bf16 %v588, %v588
  %v613 = vunpack.c.l.b16 %v597
  %v614 = vunpack.c.l.b16 %v598
  %v615 = vunpack.c.l.b16 %v599
  %v616 = vunpack.c.l.b16 %v600
  %v617 = vunpack.c.l.b16 %v601
  %v618 = vunpack.c.l.b16 %v602
  %v619 = vunpack.c.l.b16 %v603
  %v620 = vunpack.c.l.b16 %v604
  %v621 = vrot.slane %v614, 7
  %v622 = vsel %vm339, %v621, %v613
  %v623 = vrot.slane %v615, 6
  %v624 = vsel %vm342, %v623, %v622
  %v625 = vrot.slane %v616, 5
  %v626 = vsel %vm345, %v625, %v624
  %v627 = vrot.slane %v617, 4
  %v628 = vsel %vm348, %v627, %v626
  %v629 = vrot.slane %v618, 3
  %v630 = vsel %vm351, %v629, %v628
  %v631 = vrot.slane %v619, 2
  %v632 = vsel %vm354, %v631, %v630
  %v633 = vrot.slane %v620, 1
  %v634 = vsel %vm357, %v633, %v632
  %v635 = vpack.c.b16 %v634, %v634
  %636 = vrot.lane.b32.xlu0 %v635, 32
  %v637 = vpop.permute.xlu0 %636
  %v639 = vsel %vm46, %v637, 0
  %641 = vmatprep.subr.bf16.mxu0 0
  %642 = vmatpush1.bf16.msra.mxu0 0
  %643 = vmatprep.subr.bf16.mxu0 0
  %644 = vmatpush1.bf16.msra.mxu0 0
  %645 = vmatprep.subr.bf16.mxu0 0
  %646 = vmatpush1.bf16.msra.mxu0 0
  %647 = vmatprep.subr.bf16.mxu0 0
  %648 = vmatpush1.bf16.msra.mxu0 0
  %649 = vmatprep.subr.bf16.mxu0 0
  %650 = vmatpush1.bf16.msra.mxu0 0
  %651 = vmatprep.subr.bf16.mxu0 0
  %652 = vmatpush1.bf16.msra.mxu0 0
  %653 = vmatprep.subr.bf16.mxu0 0
  %654 = vmatpush1.bf16.msra.mxu0 %v43
  %655 = vmatprep.subr.bf16.mxu0 0
  %656 = vmatpush1.bf16.msra.mxu0 %v42
  %657 = vmatprep.subr.bf16.mxu0 0
  %658 = vmatpush2.bf16.msra.mxu0 0
  %659 = vmatprep.subr.bf16.mxu0 0
  %660 = vmatpush2.bf16.msra.mxu0 0
  %661 = vmatprep.subr.bf16.mxu0 0
  %662 = vmatpush2.bf16.msra.mxu0 0
  %663 = vmatprep.subr.bf16.mxu0 0
  %664 = vmatpush2.bf16.msra.mxu0 0
  %665 = vmatprep.subr.bf16.mxu0 0
  %666 = vmatpush2.bf16.msra.mxu0 0
  %667 = vmatprep.subr.bf16.mxu0 0
  %668 = vmatpush2.bf16.msra.mxu0 0
  %669 = vmatprep.subr.bf16.mxu0 0
  %670 = vmatpush2.bf16.msra.mxu0 0
  %671 = vmatprep.subr.bf16.mxu0 0
  %672 = vmatpush2.bf16.msra.mxu0 0
  %673 = vmatprep.mubr.bf16.mxu0 0
  %674 = vmatmul.mubr.bf16.gmra.mxu0 %v639
  %v675 = vpop.f32.mrf.mxu0
  %v676 = vadd.f32 0.0, %v675
  %v677 = vpop.f32.mrf.mxu0
  %v678 = vpop.f32.mrf.mxu0
  %v679 = vpop.f32.mrf.mxu0
  %680 = vdwg.mxu0
  %v682 = vrot.slane %v676, 1
  %v683 = vrot.slane %v676, 2
  %v684 = vrot.slane %v676, 3
  %v685 = vrot.slane %v676, 4
  %v686 = vrot.slane %v676, 5
  %v687 = vrot.slane %v676, 6
  %v688 = vrot.slane %v676, 7
  %v697 = vadd.f32 %v589, %v676
  %v698 = vadd.f32 %v590, %v682
  %v699 = vadd.f32 %v591, %v683
  %v700 = vadd.f32 %v592, %v684
  %v701 = vadd.f32 %v593, %v685
  %v702 = vadd.f32 %v594, %v686
  %v703 = vadd.f32 %v595, %v687
  %v704 = vadd.f32 %v596, %v688
  %v705 = vtanh.pop %v697
  %v706 = vtanh.pop %v698
  %v707 = vtanh.pop %v699
  %v708 = vtanh.pop %v700
  %v709 = vtanh.pop %v701
  %v710 = vtanh.pop %v702
  %v711 = vtanh.pop %v703
  %v712 = vtanh.pop %v704
  %v713 = vmul.f32 %v705, 0.5
  %v714 = vmul.f32 %v706, 0.5
  %v715 = vmul.f32 %v707, 0.5
  %v716 = vmul.f32 %v708, 0.5
  %v717 = vmul.f32 %v709, 0.5
  %v718 = vmul.f32 %v710, 0.5
  %v719 = vmul.f32 %v711, 0.5
  %v720 = vmul.f32 %v712, 0.5
  %v721 = vadd.f32 %v713, 0.5
  %v722 = vadd.f32 %v714, 0.5
  %v723 = vadd.f32 %v715, 0.5
  %v724 = vadd.f32 %v716, 0.5
  %v725 = vadd.f32 %v717, 0.5
  %v726 = vadd.f32 %v718, 0.5
  %v727 = vadd.f32 %v719, 0.5
  %v728 = vadd.f32 %v720, 0.5
  %v729 = vmul.f32 %v721, %v533
  %v730 = vmul.f32 %v722, %v534
  %v731 = vmul.f32 %v723, %v535
  %v732 = vmul.f32 %v724, %v536
  %v733 = vmul.f32 %v725, %v537
  %v734 = vmul.f32 %v726, %v538
  %v735 = vmul.f32 %v727, %v539
  %v736 = vmul.f32 %v728, %v540
  %745 = vrot.lane.b32.xlu0 %v705, 64
  %v746 = vpop.permute.xlu0 %745
  %747 = vrot.lane.b32.xlu0 %v706, 64
  %v748 = vpop.permute.xlu0 %747
  %749 = vrot.lane.b32.xlu0 %v707, 64
  %v750 = vpop.permute.xlu0 %749
  %751 = vrot.lane.b32.xlu0 %v708, 64
  %v752 = vpop.permute.xlu0 %751
  %753 = vrot.lane.b32.xlu0 %v709, 64
  %v754 = vpop.permute.xlu0 %753
  %755 = vrot.lane.b32.xlu0 %v710, 64
  %v756 = vpop.permute.xlu0 %755
  %757 = vrot.lane.b32.xlu0 %v711, 64
  %v758 = vpop.permute.xlu0 %757
  %759 = vrot.lane.b32.xlu0 %v712, 64
  %v760 = vpop.permute.xlu0 %759
  %v769 = vmul.f32 %v721, %v746
  %v770 = vmul.f32 %v722, %v748
  %v771 = vmul.f32 %v723, %v750
  %v772 = vmul.f32 %v724, %v752
  %v773 = vmul.f32 %v725, %v754
  %v774 = vmul.f32 %v726, %v756
  %v775 = vmul.f32 %v727, %v758
  %v776 = vmul.f32 %v728, %v760
  %785 = vrot.lane.b32.xlu0 %v769, 32
  %v786 = vpop.permute.xlu0 %785
  %787 = vrot.lane.b32.xlu0 %v770, 32
  %v788 = vpop.permute.xlu0 %787
  %789 = vrot.lane.b32.xlu0 %v771, 32
  %v790 = vpop.permute.xlu0 %789
  %791 = vrot.lane.b32.xlu0 %v772, 32
  %v792 = vpop.permute.xlu0 %791
  %793 = vrot.lane.b32.xlu0 %v773, 32
  %v794 = vpop.permute.xlu0 %793
  %795 = vrot.lane.b32.xlu0 %v774, 32
  %v796 = vpop.permute.xlu0 %795
  %797 = vrot.lane.b32.xlu0 %v775, 32
  %v798 = vpop.permute.xlu0 %797
  %799 = vrot.lane.b32.xlu0 %v776, 32
  %v800 = vpop.permute.xlu0 %799
  %v809 = vadd.f32 %v729, %v786
  %v810 = vadd.f32 %v730, %v788
  %v811 = vadd.f32 %v731, %v790
  %v812 = vadd.f32 %v732, %v792
  %v813 = vadd.f32 %v733, %v794
  %v814 = vadd.f32 %v734, %v796
  %v815 = vadd.f32 %v735, %v798
  %v816 = vadd.f32 %v736, %v800
  %v817 = vtanh.pop %v809
  %v818 = vtanh.pop %v810
  %v819 = vtanh.pop %v811
  %v820 = vtanh.pop %v812
  %v821 = vtanh.pop %v813
  %v822 = vtanh.pop %v814
  %v823 = vtanh.pop %v815
  %v824 = vtanh.pop %v816
  %833 = vrot.lane.b32.xlu0 %v817, 64
  %v834 = vpop.permute.xlu0 %833
  %835 = vrot.lane.b32.xlu0 %v818, 64
  %v836 = vpop.permute.xlu0 %835
  %837 = vrot.lane.b32.xlu0 %v819, 64
  %v838 = vpop.permute.xlu0 %837
  %839 = vrot.lane.b32.xlu0 %v820, 64
  %v840 = vpop.permute.xlu0 %839
  %841 = vrot.lane.b32.xlu0 %v821, 64
  %v842 = vpop.permute.xlu0 %841
  %843 = vrot.lane.b32.xlu0 %v822, 64
  %v844 = vpop.permute.xlu0 %843
  %845 = vrot.lane.b32.xlu0 %v823, 64
  %v846 = vpop.permute.xlu0 %845
  %847 = vrot.lane.b32.xlu0 %v824, 64
  %v848 = vpop.permute.xlu0 %847
  %v857 = vmul.f32 %v721, %v834
  %v858 = vmul.f32 %v722, %v836
  %v859 = vmul.f32 %v723, %v838
  %v860 = vmul.f32 %v724, %v840
  %v861 = vmul.f32 %v725, %v842
  %v862 = vmul.f32 %v726, %v844
  %v863 = vmul.f32 %v727, %v846
  %v864 = vmul.f32 %v728, %v848
  %v865 = vld [vmem:[%s0 + $0x3] sm:$0x1]
  %v866 = vld [vmem:[%s0 + $0xb] sm:$0x1]
  %v867 = vld [vmem:[%s0 + $0x13] sm:$0x1]
  %v868 = vld [vmem:[%s0 + $0x1b] sm:$0x1]
  %v869 = vld [vmem:[%s0 + $0x23] sm:$0x1]
  %v870 = vld [vmem:[%s0 + $0x2b] sm:$0x1]
  %v871 = vld [vmem:[%s0 + $0x33] sm:$0x1]
  %v872 = vld [vmem:[%s0 + $0x3b] sm:$0x1]
  %v873 = vpack.c.bf16 %v857, %v857
  %v874 = vpack.c.bf16 %v858, %v858
  %v875 = vpack.c.bf16 %v859, %v859
  %v876 = vpack.c.bf16 %v860, %v860
  %v877 = vpack.c.bf16 %v861, %v861
  %v878 = vpack.c.bf16 %v862, %v862
  %v879 = vpack.c.bf16 %v863, %v863
  %v880 = vpack.c.bf16 %v864, %v864
  %v889 = vunpack.c.l.b16 %v873
  %v890 = vunpack.c.l.b16 %v874
  %v891 = vunpack.c.l.b16 %v875
  %v892 = vunpack.c.l.b16 %v876
  %v893 = vunpack.c.l.b16 %v877
  %v894 = vunpack.c.l.b16 %v878
  %v895 = vunpack.c.l.b16 %v879
  %v896 = vunpack.c.l.b16 %v880
  %v897 = vrot.slane %v890, 7
  %v898 = vsel %vm339, %v897, %v889
  %v899 = vrot.slane %v891, 6
  %v900 = vsel %vm342, %v899, %v898
  %v901 = vrot.slane %v892, 5
  %v902 = vsel %vm345, %v901, %v900
  %v903 = vrot.slane %v893, 4
  %v904 = vsel %vm348, %v903, %v902
  %v905 = vrot.slane %v894, 3
  %v906 = vsel %vm351, %v905, %v904
  %v907 = vrot.slane %v895, 2
  %v908 = vsel %vm354, %v907, %v906
  %v909 = vrot.slane %v896, 1
  %v910 = vsel %vm357, %v909, %v908
  %v911 = vpack.c.b16 %v910, %v910
  %912 = vrot.lane.b32.xlu0 %v911, 32
  %v913 = vpop.permute.xlu0 %912
  %v915 = vsel %vm46, %v913, 0
  %917 = vmatprep.subr.bf16.mxu0 0
  %918 = vmatpush1.bf16.msra.mxu0 0
  %919 = vmatprep.subr.bf16.mxu0 0
  %920 = vmatpush1.bf16.msra.mxu0 0
  %921 = vmatprep.subr.bf16.mxu0 0
  %922 = vmatpush1.bf16.msra.mxu0 0
  %923 = vmatprep.subr.bf16.mxu0 0
  %924 = vmatpush1.bf16.msra.mxu0 0
  %925 = vmatprep.subr.bf16.mxu0 0
  %926 = vmatpush1.bf16.msra.mxu0 0
  %927 = vmatprep.subr.bf16.mxu0 0
  %928 = vmatpush1.bf16.msra.mxu0 0
  %929 = vmatprep.subr.bf16.mxu0 0
  %930 = vmatpush1.bf16.msra.mxu0 %v43
  %931 = vmatprep.subr.bf16.mxu0 0
  %932 = vmatpush1.bf16.msra.mxu0 %v42
  %933 = vmatprep.subr.bf16.mxu0 0
  %934 = vmatpush2.bf16.msra.mxu0 0
  %935 = vmatprep.subr.bf16.mxu0 0
  %936 = vmatpush2.bf16.msra.mxu0 0
  %937 = vmatprep.subr.bf16.mxu0 0
  %938 = vmatpush2.bf16.msra.mxu0 0
  %939 = vmatprep.subr.bf16.mxu0 0
  %940 = vmatpush2.bf16.msra.mxu0 0
  %941 = vmatprep.subr.bf16.mxu0 0
  %942 = vmatpush2.bf16.msra.mxu0 0
  %943 = vmatprep.subr.bf16.mxu0 0
  %944 = vmatpush2.bf16.msra.mxu0 0
  %945 = vmatprep.subr.bf16.mxu0 0
  %946 = vmatpush2.bf16.msra.mxu0 0
  %947 = vmatprep.subr.bf16.mxu0 0
  %948 = vmatpush2.bf16.msra.mxu0 0
  %949 = vmatprep.mubr.bf16.mxu0 0
  %950 = vmatmul.mubr.bf16.gmra.mxu0 %v915
  %v951 = vpop.f32.mrf.mxu0
  %v952 = vadd.f32 0.0, %v951
  %v953 = vpop.f32.mrf.mxu0
  %v954 = vpop.f32.mrf.mxu0
  %v955 = vpop.f32.mrf.mxu0
  %956 = vdwg.mxu0
  %v958 = vrot.slane %v952, 1
  %v959 = vrot.slane %v952, 2
  %v960 = vrot.slane %v952, 3
  %v961 = vrot.slane %v952, 4
  %v962 = vrot.slane %v952, 5
  %v963 = vrot.slane %v952, 6
  %v964 = vrot.slane %v952, 7
  %v973 = vadd.f32 %v865, %v952
  %v974 = vadd.f32 %v866, %v958
  %v975 = vadd.f32 %v867, %v959
  %v976 = vadd.f32 %v868, %v960
  %v977 = vadd.f32 %v869, %v961
  %v978 = vadd.f32 %v870, %v962
  %v979 = vadd.f32 %v871, %v963
  %v980 = vadd.f32 %v872, %v964
  %v981 = vtanh.pop %v973
  %v982 = vtanh.pop %v974
  %v983 = vtanh.pop %v975
  %v984 = vtanh.pop %v976
  %v985 = vtanh.pop %v977
  %v986 = vtanh.pop %v978
  %v987 = vtanh.pop %v979
  %v988 = vtanh.pop %v980
  %v989 = vmul.f32 %v981, 0.5
  %v990 = vmul.f32 %v982, 0.5
  %v991 = vmul.f32 %v983, 0.5
  %v992 = vmul.f32 %v984, 0.5
  %v993 = vmul.f32 %v985, 0.5
  %v994 = vmul.f32 %v986, 0.5
  %v995 = vmul.f32 %v987, 0.5
  %v996 = vmul.f32 %v988, 0.5
  %v997 = vadd.f32 %v989, 0.5
  %v998 = vadd.f32 %v990, 0.5
  %v999 = vadd.f32 %v991, 0.5
  %v1000 = vadd.f32 %v992, 0.5
  %v1001 = vadd.f32 %v993, 0.5
  %v1002 = vadd.f32 %v994, 0.5
  %v1003 = vadd.f32 %v995, 0.5
  %v1004 = vadd.f32 %v996, 0.5
  %v1005 = vmul.f32 %v997, %v809
  %v1006 = vmul.f32 %v998, %v810
  %v1007 = vmul.f32 %v999, %v811
  %v1008 = vmul.f32 %v1000, %v812
  %v1009 = vmul.f32 %v1001, %v813
  %v1010 = vmul.f32 %v1002, %v814
  %v1011 = vmul.f32 %v1003, %v815
  %v1012 = vmul.f32 %v1004, %v816
  %1021 = vrot.lane.b32.xlu0 %v981, 64
  %v1022 = vpop.permute.xlu0 %1021
  %1023 = vrot.lane.b32.xlu0 %v982, 64
  %v1024 = vpop.permute.xlu0 %1023
  %1025 = vrot.lane.b32.xlu0 %v983, 64
  %v1026 = vpop.permute.xlu0 %1025
  %1027 = vrot.lane.b32.xlu0 %v984, 64
  %v1028 = vpop.permute.xlu0 %1027
  %1029 = vrot.lane.b32.xlu0 %v985, 64
  %v1030 = vpop.permute.xlu0 %1029
  %1031 = vrot.lane.b32.xlu0 %v986, 64
  %v1032 = vpop.permute.xlu0 %1031
  %1033 = vrot.lane.b32.xlu0 %v987, 64
  %v1034 = vpop.permute.xlu0 %1033
  %1035 = vrot.lane.b32.xlu0 %v988, 64
  %v1036 = vpop.permute.xlu0 %1035
  %v1045 = vmul.f32 %v997, %v1022
  %v1046 = vmul.f32 %v998, %v1024
  %v1047 = vmul.f32 %v999, %v1026
  %v1048 = vmul.f32 %v1000, %v1028
  %v1049 = vmul.f32 %v1001, %v1030
  %v1050 = vmul.f32 %v1002, %v1032
  %v1051 = vmul.f32 %v1003, %v1034
  %v1052 = vmul.f32 %v1004, %v1036
  %1061 = vrot.lane.b32.xlu0 %v1045, 32
  %v1062 = vpop.permute.xlu0 %1061
  %1063 = vrot.lane.b32.xlu0 %v1046, 32
  %v1064 = vpop.permute.xlu0 %1063
  %1065 = vrot.lane.b32.xlu0 %v1047, 32
  %v1066 = vpop.permute.xlu0 %1065
  %1067 = vrot.lane.b32.xlu0 %v1048, 32
  %v1068 = vpop.permute.xlu0 %1067
  %1069 = vrot.lane.b32.xlu0 %v1049, 32
  %v1070 = vpop.permute.xlu0 %1069
  %1071 = vrot.lane.b32.xlu0 %v1050, 32
  %v1072 = vpop.permute.xlu0 %1071
  %1073 = vrot.lane.b32.xlu0 %v1051, 32
  %v1074 = vpop.permute.xlu0 %1073
  %1075 = vrot.lane.b32.xlu0 %v1052, 32
  %v1076 = vpop.permute.xlu0 %1075
  %v1085 = vadd.f32 %v1005, %v1062
  %v1086 = vadd.f32 %v1006, %v1064
  %v1087 = vadd.f32 %v1007, %v1066
  %v1088 = vadd.f32 %v1008, %v1068
  %v1089 = vadd.f32 %v1009, %v1070
  %v1090 = vadd.f32 %v1010, %v1072
  %v1091 = vadd.f32 %v1011, %v1074
  %v1092 = vadd.f32 %v1012, %v1076
  %v1093 = vtanh.pop %v1085
  %v1094 = vtanh.pop %v1086
  %v1095 = vtanh.pop %v1087
  %v1096 = vtanh.pop %v1088
  %v1097 = vtanh.pop %v1089
  %v1098 = vtanh.pop %v1090
  %v1099 = vtanh.pop %v1091
  %v1100 = vtanh.pop %v1092
  %1109 = vrot.lane.b32.xlu0 %v1093, 64
  %v1110 = vpop.permute.xlu0 %1109
  %1111 = vrot.lane.b32.xlu0 %v1094, 64
  %v1112 = vpop.permute.xlu0 %1111
  %1113 = vrot.lane.b32.xlu0 %v1095, 64
  %v1114 = vpop.permute.xlu0 %1113
  %1115 = vrot.lane.b32.xlu0 %v1096, 64
  %v1116 = vpop.permute.xlu0 %1115
  %1117 = vrot.lane.b32.xlu0 %v1097, 64
  %v1118 = vpop.permute.xlu0 %1117
  %1119 = vrot.lane.b32.xlu0 %v1098, 64
  %v1120 = vpop.permute.xlu0 %1119
  %1121 = vrot.lane.b32.xlu0 %v1099, 64
  %v1122 = vpop.permute.xlu0 %1121
  %1123 = vrot.lane.b32.xlu0 %v1100, 64
  %v1124 = vpop.permute.xlu0 %1123
  %v1133 = vmul.f32 %v997, %v1110
  %v1134 = vmul.f32 %v998, %v1112
  %v1135 = vmul.f32 %v999, %v1114
  %v1136 = vmul.f32 %v1000, %v1116
  %v1137 = vmul.f32 %v1001, %v1118
  %v1138 = vmul.f32 %v1002, %v1120
  %v1139 = vmul.f32 %v1003, %v1122
  %v1140 = vmul.f32 %v1004, %v1124
  %v1141 = vld [vmem:[%s0 + $0x4] sm:$0x1]
  %v1142 = vld [vmem:[%s0 + $0xc] sm:$0x1]
  %v1143 = vld [vmem:[%s0 + $0x14] sm:$0x1]
  %v1144 = vld [vmem:[%s0 + $0x1c] sm:$0x1]
  %v1145 = vld [vmem:[%s0 + $0x24] sm:$0x1]
  %v1146 = vld [vmem:[%s0 + $0x2c] sm:$0x1]
  %v1147 = vld [vmem:[%s0 + $0x34] sm:$0x1]
  %v1148 = vld [vmem:[%s0 + $0x3c] sm:$0x1]
  %v1149 = vpack.c.bf16 %v1133, %v1133
  %v1150 = vpack.c.bf16 %v1134, %v1134
  %v1151 = vpack.c.bf16 %v1135, %v1135
  %v1152 = vpack.c.bf16 %v1136, %v1136
  %v1153 = vpack.c.bf16 %v1137, %v1137
  %v1154 = vpack.c.bf16 %v1138, %v1138
  %v1155 = vpack.c.bf16 %v1139, %v1139
  %v1156 = vpack.c.bf16 %v1140, %v1140
  %v1165 = vunpack.c.l.b16 %v1149
  %v1166 = vunpack.c.l.b16 %v1150
  %v1167 = vunpack.c.l.b16 %v1151
  %v1168 = vunpack.c.l.b16 %v1152
  %v1169 = vunpack.c.l.b16 %v1153
  %v1170 = vunpack.c.l.b16 %v1154
  %v1171 = vunpack.c.l.b16 %v1155
  %v1172 = vunpack.c.l.b16 %v1156
  %v1173 = vrot.slane %v1166, 7
  %v1174 = vsel %vm339, %v1173, %v1165
  %v1175 = vrot.slane %v1167, 6
  %v1176 = vsel %vm342, %v1175, %v1174
  %v1177 = vrot.slane %v1168, 5
  %v1178 = vsel %vm345, %v1177, %v1176
  %v1179 = vrot.slane %v1169, 4
  %v1180 = vsel %vm348, %v1179, %v1178
  %v1181 = vrot.slane %v1170, 3
  %v1182 = vsel %vm351, %v1181, %v1180
  %v1183 = vrot.slane %v1171, 2
  %v1184 = vsel %vm354, %v1183, %v1182
  %v1185 = vrot.slane %v1172, 1
  %v1186 = vsel %vm357, %v1185, %v1184
  %v1187 = vpack.c.b16 %v1186, %v1186
  %1188 = vrot.lane.b32.xlu0 %v1187, 32
  %v1189 = vpop.permute.xlu0 %1188
  %v1191 = vsel %vm46, %v1189, 0
  %1193 = vmatprep.subr.bf16.mxu0 0
  %1194 = vmatpush1.bf16.msra.mxu0 0
  %1195 = vmatprep.subr.bf16.mxu0 0
  %1196 = vmatpush1.bf16.msra.mxu0 0
  %1197 = vmatprep.subr.bf16.mxu0 0
  %1198 = vmatpush1.bf16.msra.mxu0 0
  %1199 = vmatprep.subr.bf16.mxu0 0
  %1200 = vmatpush1.bf16.msra.mxu0 0
  %1201 = vmatprep.subr.bf16.mxu0 0
  %1202 = vmatpush1.bf16.msra.mxu0 0
  %1203 = vmatprep.subr.bf16.mxu0 0
  %1204 = vmatpush1.bf16.msra.mxu0 0
  %1205 = vmatprep.subr.bf16.mxu0 0
  %1206 = vmatpush1.bf16.msra.mxu0 %v43
  %1207 = vmatprep.subr.bf16.mxu0 0
  %1208 = vmatpush1.bf16.msra.mxu0 %v42
  %1209 = vmatprep.subr.bf16.mxu0 0
  %1210 = vmatpush2.bf16.msra.mxu0 0
  %1211 = vmatprep.subr.bf16.mxu0 0
  %1212 = vmatpush2.bf16.msra.mxu0 0
  %1213 = vmatprep.subr.bf16.mxu0 0
  %1214 = vmatpush2.bf16.msra.mxu0 0
  %1215 = vmatprep.subr.bf16.mxu0 0
  %1216 = vmatpush2.bf16.msra.mxu0 0
  %1217 = vmatprep.subr.bf16.mxu0 0
  %1218 = vmatpush2.bf16.msra.mxu0 0
  %1219 = vmatprep.subr.bf16.mxu0 0
  %1220 = vmatpush2.bf16.msra.mxu0 0
  %1221 = vmatprep.subr.bf16.mxu0 0
  %1222 = vmatpush2.bf16.msra.mxu0 0
  %1223 = vmatprep.subr.bf16.mxu0 0
  %1224 = vmatpush2.bf16.msra.mxu0 0
  %1225 = vmatprep.mubr.bf16.mxu0 0
  %1226 = vmatmul.mubr.bf16.gmra.mxu0 %v1191
  %v1227 = vpop.f32.mrf.mxu0
  %v1228 = vadd.f32 0.0, %v1227
  %v1229 = vpop.f32.mrf.mxu0
  %v1230 = vpop.f32.mrf.mxu0
  %v1231 = vpop.f32.mrf.mxu0
  %1232 = vdwg.mxu0
  %v1234 = vrot.slane %v1228, 1
  %v1235 = vrot.slane %v1228, 2
  %v1236 = vrot.slane %v1228, 3
  %v1237 = vrot.slane %v1228, 4
  %v1238 = vrot.slane %v1228, 5
  %v1239 = vrot.slane %v1228, 6
  %v1240 = vrot.slane %v1228, 7
  %v1249 = vadd.f32 %v1141, %v1228
  %v1250 = vadd.f32 %v1142, %v1234
  %v1251 = vadd.f32 %v1143, %v1235
  %v1252 = vadd.f32 %v1144, %v1236
  %v1253 = vadd.f32 %v1145, %v1237
  %v1254 = vadd.f32 %v1146, %v1238
  %v1255 = vadd.f32 %v1147, %v1239
  %v1256 = vadd.f32 %v1148, %v1240
  %v1257 = vtanh.pop %v1249
  %v1258 = vtanh.pop %v1250
  %v1259 = vtanh.pop %v1251
  %v1260 = vtanh.pop %v1252
  %v1261 = vtanh.pop %v1253
  %v1262 = vtanh.pop %v1254
  %v1263 = vtanh.pop %v1255
  %v1264 = vtanh.pop %v1256
  %v1265 = vmul.f32 %v1257, 0.5
  %v1266 = vmul.f32 %v1258, 0.5
  %v1267 = vmul.f32 %v1259, 0.5
  %v1268 = vmul.f32 %v1260, 0.5
  %v1269 = vmul.f32 %v1261, 0.5
  %v1270 = vmul.f32 %v1262, 0.5
  %v1271 = vmul.f32 %v1263, 0.5
  %v1272 = vmul.f32 %v1264, 0.5
  %v1273 = vadd.f32 %v1265, 0.5
  %v1274 = vadd.f32 %v1266, 0.5
  %v1275 = vadd.f32 %v1267, 0.5
  %v1276 = vadd.f32 %v1268, 0.5
  %v1277 = vadd.f32 %v1269, 0.5
  %v1278 = vadd.f32 %v1270, 0.5
  %v1279 = vadd.f32 %v1271, 0.5
  %v1280 = vadd.f32 %v1272, 0.5
  %v1281 = vmul.f32 %v1273, %v1085
  %v1282 = vmul.f32 %v1274, %v1086
  %v1283 = vmul.f32 %v1275, %v1087
  %v1284 = vmul.f32 %v1276, %v1088
  %v1285 = vmul.f32 %v1277, %v1089
  %v1286 = vmul.f32 %v1278, %v1090
  %v1287 = vmul.f32 %v1279, %v1091
  %v1288 = vmul.f32 %v1280, %v1092
  %1297 = vrot.lane.b32.xlu0 %v1257, 64
  %v1298 = vpop.permute.xlu0 %1297
  %1299 = vrot.lane.b32.xlu0 %v1258, 64
  %v1300 = vpop.permute.xlu0 %1299
  %1301 = vrot.lane.b32.xlu0 %v1259, 64
  %v1302 = vpop.permute.xlu0 %1301
  %1303 = vrot.lane.b32.xlu0 %v1260, 64
  %v1304 = vpop.permute.xlu0 %1303
  %1305 = vrot.lane.b32.xlu0 %v1261, 64
  %v1306 = vpop.permute.xlu0 %1305
  %1307 = vrot.lane.b32.xlu0 %v1262, 64
  %v1308 = vpop.permute.xlu0 %1307
  %1309 = vrot.lane.b32.xlu0 %v1263, 64
  %v1310 = vpop.permute.xlu0 %1309
  %1311 = vrot.lane.b32.xlu0 %v1264, 64
  %v1312 = vpop.permute.xlu0 %1311
  %v1321 = vmul.f32 %v1273, %v1298
  %v1322 = vmul.f32 %v1274, %v1300
  %v1323 = vmul.f32 %v1275, %v1302
  %v1324 = vmul.f32 %v1276, %v1304
  %v1325 = vmul.f32 %v1277, %v1306
  %v1326 = vmul.f32 %v1278, %v1308
  %v1327 = vmul.f32 %v1279, %v1310
  %v1328 = vmul.f32 %v1280, %v1312
  %1337 = vrot.lane.b32.xlu0 %v1321, 32
  %v1338 = vpop.permute.xlu0 %1337
  %1339 = vrot.lane.b32.xlu0 %v1322, 32
  %v1340 = vpop.permute.xlu0 %1339
  %1341 = vrot.lane.b32.xlu0 %v1323, 32
  %v1342 = vpop.permute.xlu0 %1341
  %1343 = vrot.lane.b32.xlu0 %v1324, 32
  %v1344 = vpop.permute.xlu0 %1343
  %1345 = vrot.lane.b32.xlu0 %v1325, 32
  %v1346 = vpop.permute.xlu0 %1345
  %1347 = vrot.lane.b32.xlu0 %v1326, 32
  %v1348 = vpop.permute.xlu0 %1347
  %1349 = vrot.lane.b32.xlu0 %v1327, 32
  %v1350 = vpop.permute.xlu0 %1349
  %1351 = vrot.lane.b32.xlu0 %v1328, 32
  %v1352 = vpop.permute.xlu0 %1351
  %v1361 = vadd.f32 %v1281, %v1338
  %v1362 = vadd.f32 %v1282, %v1340
  %v1363 = vadd.f32 %v1283, %v1342
  %v1364 = vadd.f32 %v1284, %v1344
  %v1365 = vadd.f32 %v1285, %v1346
  %v1366 = vadd.f32 %v1286, %v1348
  %v1367 = vadd.f32 %v1287, %v1350
  %v1368 = vadd.f32 %v1288, %v1352
  %v1369 = vtanh.pop %v1361
  %v1370 = vtanh.pop %v1362
  %v1371 = vtanh.pop %v1363
  %v1372 = vtanh.pop %v1364
  %v1373 = vtanh.pop %v1365
  %v1374 = vtanh.pop %v1366
  %v1375 = vtanh.pop %v1367
  %v1376 = vtanh.pop %v1368
  %1385 = vrot.lane.b32.xlu0 %v1369, 64
  %v1386 = vpop.permute.xlu0 %1385
  %1387 = vrot.lane.b32.xlu0 %v1370, 64
  %v1388 = vpop.permute.xlu0 %1387
  %1389 = vrot.lane.b32.xlu0 %v1371, 64
  %v1390 = vpop.permute.xlu0 %1389
  %1391 = vrot.lane.b32.xlu0 %v1372, 64
  %v1392 = vpop.permute.xlu0 %1391
  %1393 = vrot.lane.b32.xlu0 %v1373, 64
  %v1394 = vpop.permute.xlu0 %1393
  %1395 = vrot.lane.b32.xlu0 %v1374, 64
  %v1396 = vpop.permute.xlu0 %1395
  %1397 = vrot.lane.b32.xlu0 %v1375, 64
  %v1398 = vpop.permute.xlu0 %1397
  %1399 = vrot.lane.b32.xlu0 %v1376, 64
  %v1400 = vpop.permute.xlu0 %1399
  %v1409 = vmul.f32 %v1273, %v1386
  %v1410 = vmul.f32 %v1274, %v1388
  %v1411 = vmul.f32 %v1275, %v1390
  %v1412 = vmul.f32 %v1276, %v1392
  %v1413 = vmul.f32 %v1277, %v1394
  %v1414 = vmul.f32 %v1278, %v1396
  %v1415 = vmul.f32 %v1279, %v1398
  %v1416 = vmul.f32 %v1280, %v1400
  %v1417 = vld [vmem:[%s0 + $0x5] sm:$0x1]
  %v1418 = vld [vmem:[%s0 + $0xd] sm:$0x1]
  %v1419 = vld [vmem:[%s0 + $0x15] sm:$0x1]
  %v1420 = vld [vmem:[%s0 + $0x1d] sm:$0x1]
  %v1421 = vld [vmem:[%s0 + $0x25] sm:$0x1]
  %v1422 = vld [vmem:[%s0 + $0x2d] sm:$0x1]
  %v1423 = vld [vmem:[%s0 + $0x35] sm:$0x1]
  %v1424 = vld [vmem:[%s0 + $0x3d] sm:$0x1]
  %v1425 = vpack.c.bf16 %v1409, %v1409
  %v1426 = vpack.c.bf16 %v1410, %v1410
  %v1427 = vpack.c.bf16 %v1411, %v1411
  %v1428 = vpack.c.bf16 %v1412, %v1412
  %v1429 = vpack.c.bf16 %v1413, %v1413
  %v1430 = vpack.c.bf16 %v1414, %v1414
  %v1431 = vpack.c.bf16 %v1415, %v1415
  %v1432 = vpack.c.bf16 %v1416, %v1416
  %v1441 = vunpack.c.l.b16 %v1425
  %v1442 = vunpack.c.l.b16 %v1426
  %v1443 = vunpack.c.l.b16 %v1427
  %v1444 = vunpack.c.l.b16 %v1428
  %v1445 = vunpack.c.l.b16 %v1429
  %v1446 = vunpack.c.l.b16 %v1430
  %v1447 = vunpack.c.l.b16 %v1431
  %v1448 = vunpack.c.l.b16 %v1432
  %v1449 = vrot.slane %v1442, 7
  %v1450 = vsel %vm339, %v1449, %v1441
  %v1451 = vrot.slane %v1443, 6
  %v1452 = vsel %vm342, %v1451, %v1450
  %v1453 = vrot.slane %v1444, 5
  %v1454 = vsel %vm345, %v1453, %v1452
  %v1455 = vrot.slane %v1445, 4
  %v1456 = vsel %vm348, %v1455, %v1454
  %v1457 = vrot.slane %v1446, 3
  %v1458 = vsel %vm351, %v1457, %v1456
  %v1459 = vrot.slane %v1447, 2
  %v1460 = vsel %vm354, %v1459, %v1458
  %v1461 = vrot.slane %v1448, 1
  %v1462 = vsel %vm357, %v1461, %v1460
  %v1463 = vpack.c.b16 %v1462, %v1462
  %1464 = vrot.lane.b32.xlu0 %v1463, 32
  %v1465 = vpop.permute.xlu0 %1464
  %v1467 = vsel %vm46, %v1465, 0
  %1469 = vmatprep.subr.bf16.mxu0 0
  %1470 = vmatpush1.bf16.msra.mxu0 0
  %1471 = vmatprep.subr.bf16.mxu0 0
  %1472 = vmatpush1.bf16.msra.mxu0 0
  %1473 = vmatprep.subr.bf16.mxu0 0
  %1474 = vmatpush1.bf16.msra.mxu0 0
  %1475 = vmatprep.subr.bf16.mxu0 0
  %1476 = vmatpush1.bf16.msra.mxu0 0
  %1477 = vmatprep.subr.bf16.mxu0 0
  %1478 = vmatpush1.bf16.msra.mxu0 0
  %1479 = vmatprep.subr.bf16.mxu0 0
  %1480 = vmatpush1.bf16.msra.mxu0 0
  %1481 = vmatprep.subr.bf16.mxu0 0
  %1482 = vmatpush1.bf16.msra.mxu0 %v43
  %1483 = vmatprep.subr.bf16.mxu0 0
  %1484 = vmatpush1.bf16.msra.mxu0 %v42
  %1485 = vmatprep.subr.bf16.mxu0 0
  %1486 = vmatpush2.bf16.msra.mxu0 0
  %1487 = vmatprep.subr.bf16.mxu0 0
  %1488 = vmatpush2.bf16.msra.mxu0 0
  %1489 = vmatprep.subr.bf16.mxu0 0
  %1490 = vmatpush2.bf16.msra.mxu0 0
  %1491 = vmatprep.subr.bf16.mxu0 0
  %1492 = vmatpush2.bf16.msra.mxu0 0
  %1493 = vmatprep.subr.bf16.mxu0 0
  %1494 = vmatpush2.bf16.msra.mxu0 0
  %1495 = vmatprep.subr.bf16.mxu0 0
  %1496 = vmatpush2.bf16.msra.mxu0 0
  %1497 = vmatprep.subr.bf16.mxu0 0
  %1498 = vmatpush2.bf16.msra.mxu0 0
  %1499 = vmatprep.subr.bf16.mxu0 0
  %1500 = vmatpush2.bf16.msra.mxu0 0
  %1501 = vmatprep.mubr.bf16.mxu0 0
  %1502 = vmatmul.mubr.bf16.gmra.mxu0 %v1467
  %v1503 = vpop.f32.mrf.mxu0
  %v1504 = vadd.f32 0.0, %v1503
  %v1505 = vpop.f32.mrf.mxu0
  %v1506 = vpop.f32.mrf.mxu0
  %v1507 = vpop.f32.mrf.mxu0
  %1508 = vdwg.mxu0
  %v1510 = vrot.slane %v1504, 1
  %v1511 = vrot.slane %v1504, 2
  %v1512 = vrot.slane %v1504, 3
  %v1513 = vrot.slane %v1504, 4
  %v1514 = vrot.slane %v1504, 5
  %v1515 = vrot.slane %v1504, 6
  %v1516 = vrot.slane %v1504, 7
  %v1525 = vadd.f32 %v1417, %v1504
  %v1526 = vadd.f32 %v1418, %v1510
  %v1527 = vadd.f32 %v1419, %v1511
  %v1528 = vadd.f32 %v1420, %v1512
  %v1529 = vadd.f32 %v1421, %v1513
  %v1530 = vadd.f32 %v1422, %v1514
  %v1531 = vadd.f32 %v1423, %v1515
  %v1532 = vadd.f32 %v1424, %v1516
  %v1533 = vtanh.pop %v1525
  %v1534 = vtanh.pop %v1526
  %v1535 = vtanh.pop %v1527
  %v1536 = vtanh.pop %v1528
  %v1537 = vtanh.pop %v1529
  %v1538 = vtanh.pop %v1530
  %v1539 = vtanh.pop %v1531
  %v1540 = vtanh.pop %v1532
  %v1541 = vmul.f32 %v1533, 0.5
  %v1542 = vmul.f32 %v1534, 0.5
  %v1543 = vmul.f32 %v1535, 0.5
  %v1544 = vmul.f32 %v1536, 0.5
  %v1545 = vmul.f32 %v1537, 0.5
  %v1546 = vmul.f32 %v1538, 0.5
  %v1547 = vmul.f32 %v1539, 0.5
  %v1548 = vmul.f32 %v1540, 0.5
  %v1549 = vadd.f32 %v1541, 0.5
  %v1550 = vadd.f32 %v1542, 0.5
  %v1551 = vadd.f32 %v1543, 0.5
  %v1552 = vadd.f32 %v1544, 0.5
  %v1553 = vadd.f32 %v1545, 0.5
  %v1554 = vadd.f32 %v1546, 0.5
  %v1555 = vadd.f32 %v1547, 0.5
  %v1556 = vadd.f32 %v1548, 0.5
  %v1557 = vmul.f32 %v1549, %v1361
  %v1558 = vmul.f32 %v1550, %v1362
  %v1559 = vmul.f32 %v1551, %v1363
  %v1560 = vmul.f32 %v1552, %v1364
  %v1561 = vmul.f32 %v1553, %v1365
  %v1562 = vmul.f32 %v1554, %v1366
  %v1563 = vmul.f32 %v1555, %v1367
  %v1564 = vmul.f32 %v1556, %v1368
  %1573 = vrot.lane.b32.xlu0 %v1533, 64
  %v1574 = vpop.permute.xlu0 %1573
  %1575 = vrot.lane.b32.xlu0 %v1534, 64
  %v1576 = vpop.permute.xlu0 %1575
  %1577 = vrot.lane.b32.xlu0 %v1535, 64
  %v1578 = vpop.permute.xlu0 %1577
  %1579 = vrot.lane.b32.xlu0 %v1536, 64
  %v1580 = vpop.permute.xlu0 %1579
  %1581 = vrot.lane.b32.xlu0 %v1537, 64
  %v1582 = vpop.permute.xlu0 %1581
  %1583 = vrot.lane.b32.xlu0 %v1538, 64
  %v1584 = vpop.permute.xlu0 %1583
  %1585 = vrot.lane.b32.xlu0 %v1539, 64
  %v1586 = vpop.permute.xlu0 %1585
  %1587 = vrot.lane.b32.xlu0 %v1540, 64
  %v1588 = vpop.permute.xlu0 %1587
  %v1597 = vmul.f32 %v1549, %v1574
  %v1598 = vmul.f32 %v1550, %v1576
  %v1599 = vmul.f32 %v1551, %v1578
  %v1600 = vmul.f32 %v1552, %v1580
  %v1601 = vmul.f32 %v1553, %v1582
  %v1602 = vmul.f32 %v1554, %v1584
  %v1603 = vmul.f32 %v1555, %v1586
  %v1604 = vmul.f32 %v1556, %v1588
  %1613 = vrot.lane.b32.xlu0 %v1597, 32
  %v1614 = vpop.permute.xlu0 %1613
  %1615 = vrot.lane.b32.xlu0 %v1598, 32
  %v1616 = vpop.permute.xlu0 %1615
  %1617 = vrot.lane.b32.xlu0 %v1599, 32
  %v1618 = vpop.permute.xlu0 %1617
  %1619 = vrot.lane.b32.xlu0 %v1600, 32
  %v1620 = vpop.permute.xlu0 %1619
  %1621 = vrot.lane.b32.xlu0 %v1601, 32
  %v1622 = vpop.permute.xlu0 %1621
  %1623 = vrot.lane.b32.xlu0 %v1602, 32
  %v1624 = vpop.permute.xlu0 %1623
  %1625 = vrot.lane.b32.xlu0 %v1603, 32
  %v1626 = vpop.permute.xlu0 %1625
  %1627 = vrot.lane.b32.xlu0 %v1604, 32
  %v1628 = vpop.permute.xlu0 %1627
  %v1637 = vadd.f32 %v1557, %v1614
  %v1638 = vadd.f32 %v1558, %v1616
  %v1639 = vadd.f32 %v1559, %v1618
  %v1640 = vadd.f32 %v1560, %v1620
  %v1641 = vadd.f32 %v1561, %v1622
  %v1642 = vadd.f32 %v1562, %v1624
  %v1643 = vadd.f32 %v1563, %v1626
  %v1644 = vadd.f32 %v1564, %v1628
  %v1645 = vtanh.pop %v1637
  %v1646 = vtanh.pop %v1638
  %v1647 = vtanh.pop %v1639
  %v1648 = vtanh.pop %v1640
  %v1649 = vtanh.pop %v1641
  %v1650 = vtanh.pop %v1642
  %v1651 = vtanh.pop %v1643
  %v1652 = vtanh.pop %v1644
  %1661 = vrot.lane.b32.xlu0 %v1645, 64
  %v1662 = vpop.permute.xlu0 %1661
  %1663 = vrot.lane.b32.xlu0 %v1646, 64
  %v1664 = vpop.permute.xlu0 %1663
  %1665 = vrot.lane.b32.xlu0 %v1647, 64
  %v1666 = vpop.permute.xlu0 %1665
  %1667 = vrot.lane.b32.xlu0 %v1648, 64
  %v1668 = vpop.permute.xlu0 %1667
  %1669 = vrot.lane.b32.xlu0 %v1649, 64
  %v1670 = vpop.permute.xlu0 %1669
  %1671 = vrot.lane.b32.xlu0 %v1650, 64
  %v1672 = vpop.permute.xlu0 %1671
  %1673 = vrot.lane.b32.xlu0 %v1651, 64
  %v1674 = vpop.permute.xlu0 %1673
  %1675 = vrot.lane.b32.xlu0 %v1652, 64
  %v1676 = vpop.permute.xlu0 %1675
  %v1685 = vmul.f32 %v1549, %v1662
  %v1686 = vmul.f32 %v1550, %v1664
  %v1687 = vmul.f32 %v1551, %v1666
  %v1688 = vmul.f32 %v1552, %v1668
  %v1689 = vmul.f32 %v1553, %v1670
  %v1690 = vmul.f32 %v1554, %v1672
  %v1691 = vmul.f32 %v1555, %v1674
  %v1692 = vmul.f32 %v1556, %v1676
  %v1693 = vld [vmem:[%s0 + $0x6] sm:$0x1]
  %v1694 = vld [vmem:[%s0 + $0xe] sm:$0x1]
  %v1695 = vld [vmem:[%s0 + $0x16] sm:$0x1]
  %v1696 = vld [vmem:[%s0 + $0x1e] sm:$0x1]
  %v1697 = vld [vmem:[%s0 + $0x26] sm:$0x1]
  %v1698 = vld [vmem:[%s0 + $0x2e] sm:$0x1]
  %v1699 = vld [vmem:[%s0 + $0x36] sm:$0x1]
  %v1700 = vld [vmem:[%s0 + $0x3e] sm:$0x1]
  %v1701 = vpack.c.bf16 %v1685, %v1685
  %v1702 = vpack.c.bf16 %v1686, %v1686
  %v1703 = vpack.c.bf16 %v1687, %v1687
  %v1704 = vpack.c.bf16 %v1688, %v1688
  %v1705 = vpack.c.bf16 %v1689, %v1689
  %v1706 = vpack.c.bf16 %v1690, %v1690
  %v1707 = vpack.c.bf16 %v1691, %v1691
  %v1708 = vpack.c.bf16 %v1692, %v1692
  %v1717 = vunpack.c.l.b16 %v1701
  %v1718 = vunpack.c.l.b16 %v1702
  %v1719 = vunpack.c.l.b16 %v1703
  %v1720 = vunpack.c.l.b16 %v1704
  %v1721 = vunpack.c.l.b16 %v1705
  %v1722 = vunpack.c.l.b16 %v1706
  %v1723 = vunpack.c.l.b16 %v1707
  %v1724 = vunpack.c.l.b16 %v1708
  %v1725 = vrot.slane %v1718, 7
  %v1726 = vsel %vm339, %v1725, %v1717
  %v1727 = vrot.slane %v1719, 6
  %v1728 = vsel %vm342, %v1727, %v1726
  %v1729 = vrot.slane %v1720, 5
  %v1730 = vsel %vm345, %v1729, %v1728
  %v1731 = vrot.slane %v1721, 4
  %v1732 = vsel %vm348, %v1731, %v1730
  %v1733 = vrot.slane %v1722, 3
  %v1734 = vsel %vm351, %v1733, %v1732
  %v1735 = vrot.slane %v1723, 2
  %v1736 = vsel %vm354, %v1735, %v1734
  %v1737 = vrot.slane %v1724, 1
  %v1738 = vsel %vm357, %v1737, %v1736
  %v1739 = vpack.c.b16 %v1738, %v1738
  %1740 = vrot.lane.b32.xlu0 %v1739, 32
  %v1741 = vpop.permute.xlu0 %1740
  %v1743 = vsel %vm46, %v1741, 0
  %1745 = vmatprep.subr.bf16.mxu0 0
  %1746 = vmatpush1.bf16.msra.mxu0 0
  %1747 = vmatprep.subr.bf16.mxu0 0
  %1748 = vmatpush1.bf16.msra.mxu0 0
  %1749 = vmatprep.subr.bf16.mxu0 0
  %1750 = vmatpush1.bf16.msra.mxu0 0
  %1751 = vmatprep.subr.bf16.mxu0 0
  %1752 = vmatpush1.bf16.msra.mxu0 0
  %1753 = vmatprep.subr.bf16.mxu0 0
  %1754 = vmatpush1.bf16.msra.mxu0 0
  %1755 = vmatprep.subr.bf16.mxu0 0
  %1756 = vmatpush1.bf16.msra.mxu0 0
  %1757 = vmatprep.subr.bf16.mxu0 0
  %1758 = vmatpush1.bf16.msra.mxu0 %v43
  %1759 = vmatprep.subr.bf16.mxu0 0
  %1760 = vmatpush1.bf16.msra.mxu0 %v42
  %1761 = vmatprep.subr.bf16.mxu0 0
  %1762 = vmatpush2.bf16.msra.mxu0 0
  %1763 = vmatprep.subr.bf16.mxu0 0
  %1764 = vmatpush2.bf16.msra.mxu0 0
  %1765 = vmatprep.subr.bf16.mxu0 0
  %1766 = vmatpush2.bf16.msra.mxu0 0
  %1767 = vmatprep.subr.bf16.mxu0 0
  %1768 = vmatpush2.bf16.msra.mxu0 0
  %1769 = vmatprep.subr.bf16.mxu0 0
  %1770 = vmatpush2.bf16.msra.mxu0 0
  %1771 = vmatprep.subr.bf16.mxu0 0
  %1772 = vmatpush2.bf16.msra.mxu0 0
  %1773 = vmatprep.subr.bf16.mxu0 0
  %1774 = vmatpush2.bf16.msra.mxu0 0
  %1775 = vmatprep.subr.bf16.mxu0 0
  %1776 = vmatpush2.bf16.msra.mxu0 0
  %1777 = vmatprep.mubr.bf16.mxu0 0
  %1778 = vmatmul.mubr.bf16.gmra.mxu0 %v1743
  %v1779 = vpop.f32.mrf.mxu0
  %v1780 = vadd.f32 0.0, %v1779
  %v1781 = vpop.f32.mrf.mxu0
  %v1782 = vpop.f32.mrf.mxu0
  %v1783 = vpop.f32.mrf.mxu0
  %1784 = vdwg.mxu0
  %v1786 = vrot.slane %v1780, 1
  %v1787 = vrot.slane %v1780, 2
  %v1788 = vrot.slane %v1780, 3
  %v1789 = vrot.slane %v1780, 4
  %v1790 = vrot.slane %v1780, 5
  %v1791 = vrot.slane %v1780, 6
  %v1792 = vrot.slane %v1780, 7
  %v1801 = vadd.f32 %v1693, %v1780
  %v1802 = vadd.f32 %v1694, %v1786
  %v1803 = vadd.f32 %v1695, %v1787
  %v1804 = vadd.f32 %v1696, %v1788
  %v1805 = vadd.f32 %v1697, %v1789
  %v1806 = vadd.f32 %v1698, %v1790
  %v1807 = vadd.f32 %v1699, %v1791
  %v1808 = vadd.f32 %v1700, %v1792
  %v1809 = vtanh.pop %v1801
  %v1810 = vtanh.pop %v1802
  %v1811 = vtanh.pop %v1803
  %v1812 = vtanh.pop %v1804
  %v1813 = vtanh.pop %v1805
  %v1814 = vtanh.pop %v1806
  %v1815 = vtanh.pop %v1807
  %v1816 = vtanh.pop %v1808
  %v1817 = vmul.f32 %v1809, 0.5
  %v1818 = vmul.f32 %v1810, 0.5
  %v1819 = vmul.f32 %v1811, 0.5
  %v1820 = vmul.f32 %v1812, 0.5
  %v1821 = vmul.f32 %v1813, 0.5
  %v1822 = vmul.f32 %v1814, 0.5
  %v1823 = vmul.f32 %v1815, 0.5
  %v1824 = vmul.f32 %v1816, 0.5
  %v1825 = vadd.f32 %v1817, 0.5
  %v1826 = vadd.f32 %v1818, 0.5
  %v1827 = vadd.f32 %v1819, 0.5
  %v1828 = vadd.f32 %v1820, 0.5
  %v1829 = vadd.f32 %v1821, 0.5
  %v1830 = vadd.f32 %v1822, 0.5
  %v1831 = vadd.f32 %v1823, 0.5
  %v1832 = vadd.f32 %v1824, 0.5
  %v1833 = vmul.f32 %v1825, %v1637
  %v1834 = vmul.f32 %v1826, %v1638
  %v1835 = vmul.f32 %v1827, %v1639
  %v1836 = vmul.f32 %v1828, %v1640
  %v1837 = vmul.f32 %v1829, %v1641
  %v1838 = vmul.f32 %v1830, %v1642
  %v1839 = vmul.f32 %v1831, %v1643
  %v1840 = vmul.f32 %v1832, %v1644
  %1849 = vrot.lane.b32.xlu0 %v1809, 64
  %v1850 = vpop.permute.xlu0 %1849
  %1851 = vrot.lane.b32.xlu0 %v1810, 64
  %v1852 = vpop.permute.xlu0 %1851
  %1853 = vrot.lane.b32.xlu0 %v1811, 64
  %v1854 = vpop.permute.xlu0 %1853
  %1855 = vrot.lane.b32.xlu0 %v1812, 64
  %v1856 = vpop.permute.xlu0 %1855
  %1857 = vrot.lane.b32.xlu0 %v1813, 64
  %v1858 = vpop.permute.xlu0 %1857
  %1859 = vrot.lane.b32.xlu0 %v1814, 64
  %v1860 = vpop.permute.xlu0 %1859
  %1861 = vrot.lane.b32.xlu0 %v1815, 64
  %v1862 = vpop.permute.xlu0 %1861
  %1863 = vrot.lane.b32.xlu0 %v1816, 64
  %v1864 = vpop.permute.xlu0 %1863
  %v1873 = vmul.f32 %v1825, %v1850
  %v1874 = vmul.f32 %v1826, %v1852
  %v1875 = vmul.f32 %v1827, %v1854
  %v1876 = vmul.f32 %v1828, %v1856
  %v1877 = vmul.f32 %v1829, %v1858
  %v1878 = vmul.f32 %v1830, %v1860
  %v1879 = vmul.f32 %v1831, %v1862
  %v1880 = vmul.f32 %v1832, %v1864
  %1889 = vrot.lane.b32.xlu0 %v1873, 32
  %v1890 = vpop.permute.xlu0 %1889
  %1891 = vrot.lane.b32.xlu0 %v1874, 32
  %v1892 = vpop.permute.xlu0 %1891
  %1893 = vrot.lane.b32.xlu0 %v1875, 32
  %v1894 = vpop.permute.xlu0 %1893
  %1895 = vrot.lane.b32.xlu0 %v1876, 32
  %v1896 = vpop.permute.xlu0 %1895
  %1897 = vrot.lane.b32.xlu0 %v1877, 32
  %v1898 = vpop.permute.xlu0 %1897
  %1899 = vrot.lane.b32.xlu0 %v1878, 32
  %v1900 = vpop.permute.xlu0 %1899
  %1901 = vrot.lane.b32.xlu0 %v1879, 32
  %v1902 = vpop.permute.xlu0 %1901
  %1903 = vrot.lane.b32.xlu0 %v1880, 32
  %v1904 = vpop.permute.xlu0 %1903
  %v1913 = vadd.f32 %v1833, %v1890
  %v1914 = vadd.f32 %v1834, %v1892
  %v1915 = vadd.f32 %v1835, %v1894
  %v1916 = vadd.f32 %v1836, %v1896
  %v1917 = vadd.f32 %v1837, %v1898
  %v1918 = vadd.f32 %v1838, %v1900
  %v1919 = vadd.f32 %v1839, %v1902
  %v1920 = vadd.f32 %v1840, %v1904
  %v1921 = vtanh.pop %v1913
  %v1922 = vtanh.pop %v1914
  %v1923 = vtanh.pop %v1915
  %v1924 = vtanh.pop %v1916
  %v1925 = vtanh.pop %v1917
  %v1926 = vtanh.pop %v1918
  %v1927 = vtanh.pop %v1919
  %v1928 = vtanh.pop %v1920
  %1937 = vrot.lane.b32.xlu0 %v1921, 64
  %v1938 = vpop.permute.xlu0 %1937
  %1939 = vrot.lane.b32.xlu0 %v1922, 64
  %v1940 = vpop.permute.xlu0 %1939
  %1941 = vrot.lane.b32.xlu0 %v1923, 64
  %v1942 = vpop.permute.xlu0 %1941
  %1943 = vrot.lane.b32.xlu0 %v1924, 64
  %v1944 = vpop.permute.xlu0 %1943
  %1945 = vrot.lane.b32.xlu0 %v1925, 64
  %v1946 = vpop.permute.xlu0 %1945
  %1947 = vrot.lane.b32.xlu0 %v1926, 64
  %v1948 = vpop.permute.xlu0 %1947
  %1949 = vrot.lane.b32.xlu0 %v1927, 64
  %v1950 = vpop.permute.xlu0 %1949
  %1951 = vrot.lane.b32.xlu0 %v1928, 64
  %v1952 = vpop.permute.xlu0 %1951
  %v1961 = vmul.f32 %v1825, %v1938
  %v1962 = vmul.f32 %v1826, %v1940
  %v1963 = vmul.f32 %v1827, %v1942
  %v1964 = vmul.f32 %v1828, %v1944
  %v1965 = vmul.f32 %v1829, %v1946
  %v1966 = vmul.f32 %v1830, %v1948
  %v1967 = vmul.f32 %v1831, %v1950
  %v1968 = vmul.f32 %v1832, %v1952
  %v1969 = vld [vmem:[%s0 + $0x7] sm:$0x1]
  %v1970 = vld [vmem:[%s0 + $0xf] sm:$0x1]
  %v1971 = vld [vmem:[%s0 + $0x17] sm:$0x1]
  %v1972 = vld [vmem:[%s0 + $0x1f] sm:$0x1]
  %v1973 = vld [vmem:[%s0 + $0x27] sm:$0x1]
  %v1974 = vld [vmem:[%s0 + $0x2f] sm:$0x1]
  %v1975 = vld [vmem:[%s0 + $0x37] sm:$0x1]
  %v1976 = vld [vmem:[%s0 + $0x3f] sm:$0x1]
  %v1977 = vpack.c.bf16 %v1961, %v1961
  %v1978 = vpack.c.bf16 %v1962, %v1962
  %v1979 = vpack.c.bf16 %v1963, %v1963
  %v1980 = vpack.c.bf16 %v1964, %v1964
  %v1981 = vpack.c.bf16 %v1965, %v1965
  %v1982 = vpack.c.bf16 %v1966, %v1966
  %v1983 = vpack.c.bf16 %v1967, %v1967
  %v1984 = vpack.c.bf16 %v1968, %v1968
  %v1993 = vunpack.c.l.b16 %v1977
  %v1994 = vunpack.c.l.b16 %v1978
  %v1995 = vunpack.c.l.b16 %v1979
  %v1996 = vunpack.c.l.b16 %v1980
  %v1997 = vunpack.c.l.b16 %v1981
  %v1998 = vunpack.c.l.b16 %v1982
  %v1999 = vunpack.c.l.b16 %v1983
  %v2000 = vunpack.c.l.b16 %v1984
  %v2001 = vrot.slane %v1994, 7
  %v2002 = vsel %vm339, %v2001, %v1993
  %v2003 = vrot.slane %v1995, 6
  %v2004 = vsel %vm342, %v2003, %v2002
  %v2005 = vrot.slane %v1996, 5
  %v2006 = vsel %vm345, %v2005, %v2004
  %v2007 = vrot.slane %v1997, 4
  %v2008 = vsel %vm348, %v2007, %v2006
  %v2009 = vrot.slane %v1998, 3
  %v2010 = vsel %vm351, %v2009, %v2008
  %v2011 = vrot.slane %v1999, 2
  %v2012 = vsel %vm354, %v2011, %v2010
  %v2013 = vrot.slane %v2000, 1
  %v2014 = vsel %vm357, %v2013, %v2012
  %v2015 = vpack.c.b16 %v2014, %v2014
  %2016 = vrot.lane.b32.xlu0 %v2015, 32
  %v2017 = vpop.permute.xlu0 %2016
  %v2019 = vsel %vm46, %v2017, 0
  %2021 = vmatprep.subr.bf16.mxu0 0
  %2022 = vmatpush1.bf16.msra.mxu0 0
  %2023 = vmatprep.subr.bf16.mxu0 0
  %2024 = vmatpush1.bf16.msra.mxu0 0
  %2025 = vmatprep.subr.bf16.mxu0 0
  %2026 = vmatpush1.bf16.msra.mxu0 0
  %2027 = vmatprep.subr.bf16.mxu0 0
  %2028 = vmatpush1.bf16.msra.mxu0 0
  %2029 = vmatprep.subr.bf16.mxu0 0
  %2030 = vmatpush1.bf16.msra.mxu0 0
  %2031 = vmatprep.subr.bf16.mxu0 0
  %2032 = vmatpush1.bf16.msra.mxu0 0
  %2033 = vmatprep.subr.bf16.mxu0 0
  %2034 = vmatpush1.bf16.msra.mxu0 %v43
  %2035 = vmatprep.subr.bf16.mxu0 0
  %2036 = vmatpush1.bf16.msra.mxu0 %v42
  %2037 = vmatprep.subr.bf16.mxu0 0
  %2038 = vmatpush2.bf16.msra.mxu0 0
  %2039 = vmatprep.subr.bf16.mxu0 0
  %2040 = vmatpush2.bf16.msra.mxu0 0
  %2041 = vmatprep.subr.bf16.mxu0 0
  %2042 = vmatpush2.bf16.msra.mxu0 0
  %2043 = vmatprep.subr.bf16.mxu0 0
  %2044 = vmatpush2.bf16.msra.mxu0 0
  %2045 = vmatprep.subr.bf16.mxu0 0
  %2046 = vmatpush2.bf16.msra.mxu0 0
  %2047 = vmatprep.subr.bf16.mxu0 0
  %2048 = vmatpush2.bf16.msra.mxu0 0
  %2049 = vmatprep.subr.bf16.mxu0 0
  %2050 = vmatpush2.bf16.msra.mxu0 0
  %2051 = vmatprep.subr.bf16.mxu0 0
  %2052 = vmatpush2.bf16.msra.mxu0 0
  %2053 = vmatprep.mubr.bf16.mxu0 0
  %2054 = vmatmul.mubr.bf16.gmra.mxu0 %v2019
  %v2055 = vpop.f32.mrf.mxu0
  %v2056 = vadd.f32 0.0, %v2055
  %v2057 = vpop.f32.mrf.mxu0
  %v2058 = vpop.f32.mrf.mxu0
  %v2059 = vpop.f32.mrf.mxu0
  %2060 = vdwg.mxu0
  %v2062 = vrot.slane %v2056, 1
  %v2063 = vrot.slane %v2056, 2
  %v2064 = vrot.slane %v2056, 3
  %v2065 = vrot.slane %v2056, 4
  %v2066 = vrot.slane %v2056, 5
  %v2067 = vrot.slane %v2056, 6
  %v2068 = vrot.slane %v2056, 7
  %v2077 = vadd.f32 %v1969, %v2056
  %v2078 = vadd.f32 %v1970, %v2062
  %v2079 = vadd.f32 %v1971, %v2063
  %v2080 = vadd.f32 %v1972, %v2064
  %v2081 = vadd.f32 %v1973, %v2065
  %v2082 = vadd.f32 %v1974, %v2066
  %v2083 = vadd.f32 %v1975, %v2067
  %v2084 = vadd.f32 %v1976, %v2068
  %v2085 = vtanh.pop %v2077
  %v2086 = vtanh.pop %v2078
  %v2087 = vtanh.pop %v2079
  %v2088 = vtanh.pop %v2080
  %v2089 = vtanh.pop %v2081
  %v2090 = vtanh.pop %v2082
  %v2091 = vtanh.pop %v2083
  %v2092 = vtanh.pop %v2084
  %v2093 = vmul.f32 %v2085, 0.5
  %v2094 = vmul.f32 %v2086, 0.5
  %v2095 = vmul.f32 %v2087, 0.5
  %v2096 = vmul.f32 %v2088, 0.5
  %v2097 = vmul.f32 %v2089, 0.5
  %v2098 = vmul.f32 %v2090, 0.5
  %v2099 = vmul.f32 %v2091, 0.5
  %v2100 = vmul.f32 %v2092, 0.5
  %v2101 = vadd.f32 %v2093, 0.5
  %v2102 = vadd.f32 %v2094, 0.5
  %v2103 = vadd.f32 %v2095, 0.5
  %v2104 = vadd.f32 %v2096, 0.5
  %v2105 = vadd.f32 %v2097, 0.5
  %v2106 = vadd.f32 %v2098, 0.5
  %v2107 = vadd.f32 %v2099, 0.5
  %v2108 = vadd.f32 %v2100, 0.5
  %v2109 = vmul.f32 %v2101, %v1913
  %v2110 = vmul.f32 %v2102, %v1914
  %v2111 = vmul.f32 %v2103, %v1915
  %v2112 = vmul.f32 %v2104, %v1916
  %v2113 = vmul.f32 %v2105, %v1917
  %v2114 = vmul.f32 %v2106, %v1918
  %v2115 = vmul.f32 %v2107, %v1919
  %v2116 = vmul.f32 %v2108, %v1920
  %2125 = vrot.lane.b32.xlu0 %v2085, 64
  %v2126 = vpop.permute.xlu0 %2125
  %2127 = vrot.lane.b32.xlu0 %v2086, 64
  %v2128 = vpop.permute.xlu0 %2127
  %2129 = vrot.lane.b32.xlu0 %v2087, 64
  %v2130 = vpop.permute.xlu0 %2129
  %2131 = vrot.lane.b32.xlu0 %v2088, 64
  %v2132 = vpop.permute.xlu0 %2131
  %2133 = vrot.lane.b32.xlu0 %v2089, 64
  %v2134 = vpop.permute.xlu0 %2133
  %2135 = vrot.lane.b32.xlu0 %v2090, 64
  %v2136 = vpop.permute.xlu0 %2135
  %2137 = vrot.lane.b32.xlu0 %v2091, 64
  %v2138 = vpop.permute.xlu0 %2137
  %2139 = vrot.lane.b32.xlu0 %v2092, 64
  %v2140 = vpop.permute.xlu0 %2139
  %v2149 = vmul.f32 %v2101, %v2126
  %v2150 = vmul.f32 %v2102, %v2128
  %v2151 = vmul.f32 %v2103, %v2130
  %v2152 = vmul.f32 %v2104, %v2132
  %v2153 = vmul.f32 %v2105, %v2134
  %v2154 = vmul.f32 %v2106, %v2136
  %v2155 = vmul.f32 %v2107, %v2138
  %v2156 = vmul.f32 %v2108, %v2140
  %2165 = vrot.lane.b32.xlu0 %v2149, 32
  %v2166 = vpop.permute.xlu0 %2165
  %2167 = vrot.lane.b32.xlu0 %v2150, 32
  %v2168 = vpop.permute.xlu0 %2167
  %2169 = vrot.lane.b32.xlu0 %v2151, 32
  %v2170 = vpop.permute.xlu0 %2169
  %2171 = vrot.lane.b32.xlu0 %v2152, 32
  %v2172 = vpop.permute.xlu0 %2171
  %2173 = vrot.lane.b32.xlu0 %v2153, 32
  %v2174 = vpop.permute.xlu0 %2173
  %2175 = vrot.lane.b32.xlu0 %v2154, 32
  %v2176 = vpop.permute.xlu0 %2175
  %2177 = vrot.lane.b32.xlu0 %v2155, 32
  %v2178 = vpop.permute.xlu0 %2177
  %2179 = vrot.lane.b32.xlu0 %v2156, 32
  %v2180 = vpop.permute.xlu0 %2179
  %v2189 = vadd.f32 %v2109, %v2166
  %v2190 = vadd.f32 %v2110, %v2168
  %v2191 = vadd.f32 %v2111, %v2170
  %v2192 = vadd.f32 %v2112, %v2172
  %v2193 = vadd.f32 %v2113, %v2174
  %v2194 = vadd.f32 %v2114, %v2176
  %v2195 = vadd.f32 %v2115, %v2178
  %v2196 = vadd.f32 %v2116, %v2180
  %v2197 = vtanh.pop %v2189
  %v2198 = vtanh.pop %v2190
  %v2199 = vtanh.pop %v2191
  %v2200 = vtanh.pop %v2192
  %v2201 = vtanh.pop %v2193
  %v2202 = vtanh.pop %v2194
  %v2203 = vtanh.pop %v2195
  %v2204 = vtanh.pop %v2196
  %2213 = vrot.lane.b32.xlu0 %v2197, 64
  %v2214 = vpop.permute.xlu0 %2213
  %2215 = vrot.lane.b32.xlu0 %v2198, 64
  %v2216 = vpop.permute.xlu0 %2215
  %2217 = vrot.lane.b32.xlu0 %v2199, 64
  %v2218 = vpop.permute.xlu0 %2217
  %2219 = vrot.lane.b32.xlu0 %v2200, 64
  %v2220 = vpop.permute.xlu0 %2219
  %2221 = vrot.lane.b32.xlu0 %v2201, 64
  %v2222 = vpop.permute.xlu0 %2221
  %2223 = vrot.lane.b32.xlu0 %v2202, 64
  %v2224 = vpop.permute.xlu0 %2223
  %2225 = vrot.lane.b32.xlu0 %v2203, 64
  %v2226 = vpop.permute.xlu0 %2225
  %2227 = vrot.lane.b32.xlu0 %v2204, 64
  %v2228 = vpop.permute.xlu0 %2227
  %v2237 = vmul.f32 %v2101, %v2214
  %v2238 = vmul.f32 %v2102, %v2216
  %v2239 = vmul.f32 %v2103, %v2218
  %v2240 = vmul.f32 %v2104, %v2220
  %v2241 = vmul.f32 %v2105, %v2222
  %v2242 = vmul.f32 %v2106, %v2224
  %v2243 = vmul.f32 %v2107, %v2226
  %v2244 = vmul.f32 %v2108, %v2228
  %v2253 = vrot.slane %v2238, 7
  %v2254 = vsel %vm339, %v2253, %v2237
  %v2255 = vrot.slane %v2239, 6
  %v2256 = vsel %vm342, %v2255, %v2254
  %v2257 = vrot.slane %v2240, 5
  %v2258 = vsel %vm345, %v2257, %v2256
  %v2259 = vrot.slane %v2241, 4
  %v2260 = vsel %vm348, %v2259, %v2258
  %v2261 = vrot.slane %v2242, 3
  %v2262 = vsel %vm351, %v2261, %v2260
  %v2263 = vrot.slane %v2243, 2
  %v2264 = vsel %vm354, %v2263, %v2262
  %v2265 = vrot.slane %v2244, 1
  %v2266 = vsel %vm357, %v2265, %v2264
  %2267 = vrot.lane.b32.xlu0 %v2266, 32
  %v2268 = vpop.permute.xlu0 %2267
  %2270 = vst.msk [vmem:[#allocation2] sm:$0xff] %vm46, %v2268
  %v2279 = vrot.slane %v2190, 7
  %v2280 = vsel %vm339, %v2279, %v2189
  %v2281 = vrot.slane %v2191, 6
  %v2282 = vsel %vm342, %v2281, %v2280
  %v2283 = vrot.slane %v2192, 5
  %v2284 = vsel %vm345, %v2283, %v2282
  %v2285 = vrot.slane %v2193, 4
  %v2286 = vsel %vm348, %v2285, %v2284
  %v2287 = vrot.slane %v2194, 3
  %v2288 = vsel %vm351, %v2287, %v2286
  %v2289 = vrot.slane %v2195, 2
  %v2290 = vsel %vm354, %v2289, %v2288
  %v2291 = vrot.slane %v2196, 1
  %v2292 = vsel %vm357, %v2291, %v2290
  %2293 = vrot.lane.b32.xlu0 %v2292, 96
  %v2294 = vpop.permute.xlu0 %2293
  %2296 = vst.msk [vmem:[#allocation3] sm:$0xff] %vm46, %v2294
  %v2305 = vrot.slane %v299, 7
  %v2306 = vsel %vm339, %v2305, %v298
  %v2307 = vrot.slane %v300, 6
  %v2308 = vsel %vm342, %v2307, %v2306
  %v2309 = vrot.slane %v301, 5
  %v2310 = vsel %vm345, %v2309, %v2308
  %v2311 = vrot.slane %v302, 4
  %v2312 = vsel %vm348, %v2311, %v2310
  %v2313 = vrot.slane %v303, 3
  %v2314 = vsel %vm351, %v2313, %v2312
  %v2315 = vrot.slane %v304, 2
  %v2316 = vsel %vm354, %v2315, %v2314
  %v2317 = vrot.slane %v305, 1
  %v2318 = vsel %vm357, %v2317, %v2316
  %2319 = vrot.lane.b32.xlu0 %v2318, 32
  %v2320 = vpop.permute.xlu0 %2319
  %v2330 = vrot.slane %v582, 7
  %v2331 = vsel %vm339, %v2330, %v581
  %v2332 = vrot.slane %v583, 6
  %v2333 = vsel %vm342, %v2332, %v2331
  %v2334 = vrot.slane %v584, 5
  %v2335 = vsel %vm345, %v2334, %v2333
  %v2336 = vrot.slane %v585, 4
  %v2337 = vsel %vm348, %v2336, %v2335
  %v2338 = vrot.slane %v586, 3
  %v2339 = vsel %vm351, %v2338, %v2337
  %v2340 = vrot.slane %v587, 2
  %v2341 = vsel %vm354, %v2340, %v2339
  %v2342 = vrot.slane %v588, 1
  %v2343 = vsel %vm357, %v2342, %v2341
  %2344 = vrot.lane.b32.xlu0 %v2343, 64
  %v2345 = vpop.permute.xlu0 %2344
  %v2355 = vrot.slane %v858, 7
  %v2356 = vsel %vm339, %v2355, %v857
  %v2357 = vrot.slane %v859, 6
  %v2358 = vsel %vm342, %v2357, %v2356
  %v2359 = vrot.slane %v860, 5
  %v2360 = vsel %vm345, %v2359, %v2358
  %v2361 = vrot.slane %v861, 4
  %v2362 = vsel %vm348, %v2361, %v2360
  %v2363 = vrot.slane %v862, 3
  %v2364 = vsel %vm351, %v2363, %v2362
  %v2365 = vrot.slane %v863, 2
  %v2366 = vsel %vm354, %v2365, %v2364
  %v2367 = vrot.slane %v864, 1
  %v2368 = vsel %vm357, %v2367, %v2366
  %2369 = vrot.lane.b32.xlu0 %v2368, 96
  %v2370 = vpop.permute.xlu0 %2369
  %v2380 = vrot.slane %v1134, 7
  %v2381 = vsel %vm339, %v2380, %v1133
  %v2382 = vrot.slane %v1135, 6
  %v2383 = vsel %vm342, %v2382, %v2381
  %v2384 = vrot.slane %v1136, 5
  %v2385 = vsel %vm345, %v2384, %v2383
  %v2386 = vrot.slane %v1137, 4
  %v2387 = vsel %vm348, %v2386, %v2385
  %v2388 = vrot.slane %v1138, 3
  %v2389 = vsel %vm351, %v2388, %v2387
  %v2390 = vrot.slane %v1139, 2
  %v2391 = vsel %vm354, %v2390, %v2389
  %v2392 = vrot.slane %v1140, 1
  %v2393 = vsel %vm357, %v2392, %v2391
  %v2403 = vrot.slane %v1410, 7
  %v2404 = vsel %vm339, %v2403, %v1409
  %v2405 = vrot.slane %v1411, 6
  %v2406 = vsel %vm342, %v2405, %v2404
  %v2407 = vrot.slane %v1412, 5
  %v2408 = vsel %vm345, %v2407, %v2406
  %v2409 = vrot.slane %v1413, 4
  %v2410 = vsel %vm348, %v2409, %v2408
  %v2411 = vrot.slane %v1414, 3
  %v2412 = vsel %vm351, %v2411, %v2410
  %v2413 = vrot.slane %v1415, 2
  %v2414 = vsel %vm354, %v2413, %v2412
  %v2415 = vrot.slane %v1416, 1
  %v2416 = vsel %vm357, %v2415, %v2414
  %2417 = vrot.lane.b32.xlu0 %v2416, 32
  %v2418 = vpop.permute.xlu0 %2417
  %v2428 = vrot.slane %v1686, 7
  %v2429 = vsel %vm339, %v2428, %v1685
  %v2430 = vrot.slane %v1687, 6
  %v2431 = vsel %vm342, %v2430, %v2429
  %v2432 = vrot.slane %v1688, 5
  %v2433 = vsel %vm345, %v2432, %v2431
  %v2434 = vrot.slane %v1689, 4
  %v2435 = vsel %vm348, %v2434, %v2433
  %v2436 = vrot.slane %v1690, 3
  %v2437 = vsel %vm351, %v2436, %v2435
  %v2438 = vrot.slane %v1691, 2
  %v2439 = vsel %vm354, %v2438, %v2437
  %v2440 = vrot.slane %v1692, 1
  %v2441 = vsel %vm357, %v2440, %v2439
  %2442 = vrot.lane.b32.xlu0 %v2441, 64
  %v2443 = vpop.permute.xlu0 %2442
  %v2453 = vrot.slane %v1962, 7
  %v2454 = vsel %vm339, %v2453, %v1961
  %v2455 = vrot.slane %v1963, 6
  %v2456 = vsel %vm342, %v2455, %v2454
  %v2457 = vrot.slane %v1964, 5
  %v2458 = vsel %vm345, %v2457, %v2456
  %v2459 = vrot.slane %v1965, 4
  %v2460 = vsel %vm348, %v2459, %v2458
  %v2461 = vrot.slane %v1966, 3
  %v2462 = vsel %vm351, %v2461, %v2460
  %v2463 = vrot.slane %v1967, 2
  %v2464 = vsel %vm354, %v2463, %v2462
  %v2465 = vrot.slane %v1968, 1
  %v2466 = vsel %vm357, %v2465, %v2464
  %2467 = vrot.lane.b32.xlu0 %v2466, 96
  %v2468 = vpop.permute.xlu0 %2467
  %v2471 = vsel %vm46, %v2320, %v2345
  %vm2472 = vcmask 523264
  %v2473 = vsel %vm2472, %v2471, %v2370
  %vm2474 = vcmask 785408
  %v2475 = vsel %vm2474, %v2473, %v2393
  %v2476 = vsel %vm46, %v2418, %v2443
  %v2477 = vsel %vm2472, %v2476, %v2468
  %v2478 = vsel %vm2474, %v2477, %v2266
  %2479 = vst [vmem:[%s2] sm:$0xff] %v2475
  %2480 = vst [vmem:[%s2 + $0x8] sm:$0xff] %v2478
  // Predicated region
  $region14: #{lstm_feature_extractor_pallas.1} parent=0 // pred_check
    _
  $region15: #{lstm_feature_extractor_pallas.1} parent=0 // pred_check_branch
    %2482 = sbr.rel (0) target = $region17
  $region16: #{lstm_feature_extractor_pallas.1} parent=0 // pred_region
    _
  $region17: #{lstm_feature_extractor_pallas.1} parent=0 // pred_fallthru
    _
  // Predicated region
  $region18: #{lstm_feature_extractor_pallas.1} parent=0 // pred_check
    _
  $region19: #{lstm_feature_extractor_pallas.1} parent=0 // pred_check_branch
    %2484 = sbr.rel (0) target = $region21
  $region20: #{lstm_feature_extractor_pallas.1} parent=0 // pred_region
    _
  $region21: #{lstm_feature_extractor_pallas.1} parent=0 // pred_fallthru
    _

</llo_original>
